<compile_context>
chip_gen: v5e
topology: v5e:2x2
jax: 0.10.0
libtpu: 0.0.40
codegen_flags: <defaults>
</compile_context>

<pallas_src>
import functools

import jax
import jax.numpy as jnp
from jax.experimental import pallas as pl
from jax.experimental.pallas import tpu as pltpu

NEG_SLOPE = 0.01  # torch.nn.LeakyReLU default


def _leaky_relu(v):
    # max(v, a*v) == LeakyReLU(v) for 0 < a < 1 (2 VPU ops, no compare+select).
    return jnp.maximum(v, NEG_SLOPE * v)


def res_stack_kernel(x_ref, w_ref, b_ref, o_ref, *scratch, T, mxu_dtype):
    """One batch group per grid step; whole 4-block residual stack in-kernel.

    x_ref : (1, C, L) activations, L = G*T (G samples folded along lanes)
    w_ref : (8, C, 3C) tap-packed conv weights (dtype = mxu_dtype)
    b_ref : (8, C, 1)  f32 biases
    o_ref : (1, C, L)
    scratch (optional): (3C, L) mxu_dtype staging buffer for the packed taps
    """
    s_ref = scratch[0] if scratch else None

    h = x_ref[0].astype(jnp.float32)               # (C, L) f32 working copy
    C, L = h.shape

    # Single (1, L) position row: lane index within its folded sample.  The
    # per-conv validity compares below broadcast over sublanes, so no
    # full-shape masks are ever materialized.
    pos = jax.lax.broadcasted_iota(jnp.int32, (1, L), 1) % T

    def conv1d(v, layer, d):
        # out[co, l] = b[co] + sum_{k,ci} W[layer, co, ci, k] * v[ci, l+(k-1)d]
        ok_m = pos >= d          # tap k=0: v[ci, l-d] stays inside its sample
        ok_p = pos < (T - d)     # tap k=2: v[ci, l+d] stays inside its sample
        vm = jnp.where(ok_m, pltpu.roll(v, shift=d % L, axis=1), 0.0)
        vp = jnp.where(ok_p, pltpu.roll(v, shift=(L - d) % L, axis=1), 0.0)
        if s_ref is not None:
            # Tile-aligned writes into one reusable scratch (bounded footprint,
            # cast to the MXU dtype before the stores).
            s_ref[pl.ds(0, C), :] = vm.astype(mxu_dtype)
            s_ref[pl.ds(C, C), :] = v.astype(mxu_dtype)
            s_ref[pl.ds(2 * C, C), :] = vp.astype(mxu_dtype)
            s = s_ref[...]                                        # (3C, L)
        else:
            # Cast BEFORE the concat (halves the concat traffic in bf16).
            s = jnp.concatenate(
                [vm.astype(mxu_dtype), v.astype(mxu_dtype), vp.astype(mxu_dtype)],
                axis=0)                                           # (3C, L)
        # One tap-packed MXU matmul per conv, f32 accumulation.
        acc = jnp.dot(w_ref[layer], s, preferred_element_type=jnp.float32)
        return acc + b_ref[layer]                                 # (C,1) bcast

    for i in range(4):
        d = 3 ** i
        y = _leaky_relu(h)
        y = conv1d(y, 2 * i, d)        # dilated conv, padding = dilation
        y = _leaky_relu(y)
        y = conv1d(y, 2 * i + 1, 1)    # plain conv, padding = 1
        h = h + y                      # residual add (f32)

    o_ref[0] = h.astype(o_ref.dtype)


def _vmem_capacity_bytes():
    try:
        return int(pltpu.get_tpu_info().vmem_capacity_bytes)
    except Exception:
        return 64 * 1024 * 1024        # conservative default (v7x per-TC VMEM)


def _vmem_limit_bytes(C, L, x_itemsize, w_itemsize):
    io = 2 * 2 * C * L * x_itemsize                       # dbl-buffered in+out
    wgt = 2 * (8 * C * 3 * C * w_itemsize + 8 * C * 4)    # weights+bias (worst case 2 bufs)
    scr = 3 * C * L * w_itemsize                          # packed-tap staging
    body = 6 * C * L * 4                                  # f32 temporaries in the body
    need = int((io + wgt + scr + body) * 1.5) + (2 << 20)
    cap = _vmem_capacity_bytes()
    return int(min(max(need, 16 << 20), cap * 3 // 4))


def _pick_group(N, T, target_lanes=2048, min_grid=4):
    """Batch-fold factor: widen lanes for small T while keeping the grid
    length >= min_grid (>= 2 steps per TensorCore on v7x) and even."""
    if T >= 512:
        return 1      # already lane-dense per sample; skip fold/unfold relayout
    cap = max(1, target_lanes // max(T, 1))
    divisors = [g for g in range(1, N + 1) if N % g == 0]
    cands = [g for g in divisors if g <= cap] or [1]

    def score(g):
        ng = N // g
        return (ng >= min_grid,            # pipeline depth / megacore steps
                ng % 2 == 0 or ng == 1,    # balanced across 2 TensorCores
                ng >= 2,                   # at least shardable
                g)                         # then: widest lanes
    return max(cands, key=score)


def res_stack_pallas(x, W, B, *, group=None, mxu_dtype=jnp.bfloat16,
                     target_lanes=2048, single_buffer_consts=True):
    """x: (N, C, T) f32; W: (8, C, C, 3) effective conv weights; B: (8, C)."""
    N, C, T = x.shape
    if group is None:
        group = _pick_group(N, T, target_lanes=target_lanes)
    NG = N // group
    L = group * T

    # Lane-dense activation slab (each sample is a contiguous T-lane chunk).
    if group == 1:
        xg = x
    else:
        xg = x.reshape(NG, group, C, T).transpose(0, 2, 1, 3).reshape(NG, C, L)

    # Tap-packed weights: Wp[l, co, k*C + ci] = W[l, co, ci, k]  -> (8, C, 3C).
    Wp = jnp.transpose(W, (0, 1, 3, 2)).reshape(8, C, 3 * C).astype(mxu_dtype)
    Bk = B[:, :, None].astype(jnp.float32)                       # (8, C, 1)

    w_itemsize = jnp.dtype(mxu_dtype).itemsize
    pack = 32 // w_itemsize          # sublane packing: 8 (f32), 16 (bf16), 32 (8-bit)
    use_scratch = (C % pack == 0)    # tile-aligned sub-stores only
    scratch_shapes = [pltpu.VMEM((3 * C, L), mxu_dtype)] if use_scratch else []

    vmem_limit = _vmem_limit_bytes(C, L, jnp.dtype(x.dtype).itemsize, w_itemsize)

    def _const_spec(shape, buffered):
        if buffered:
            # Constant-index block: single-buffer to halve resident weight VMEM.
            return pl.BlockSpec(shape, lambda n: (0, 0, 0),
                                pipeline_mode=pl.Buffered(1))
        return pl.BlockSpec(shape, lambda n: (0, 0, 0))

    def _call(buffered):
        return pl.pallas_call(
            functools.partial(res_stack_kernel, T=T, mxu_dtype=mxu_dtype),
            out_shape=jax.ShapeDtypeStruct((NG, C, L), x.dtype),
            grid=(NG,),
            in_specs=[
                pl.BlockSpec((1, C, L), lambda n: (n, 0, 0)),
                _const_spec((8, C, 3 * C), buffered),
                _const_spec((8, C, 1), buffered),
            ],
            out_specs=pl.BlockSpec((1, C, L), lambda n: (n, 0, 0)),
            scratch_shapes=scratch_shapes,
            compiler_params=pltpu.CompilerParams(
                dimension_semantics=("parallel",),
                vmem_limit_bytes=vmem_limit),
        )(xg, Wp, Bk)

    if single_buffer_consts:
        try:
            out = _call(True)
        except Exception:
            # pipeline_mode=pl.Buffered(1) not supported on this jax build:
            # fall back to default (double-buffered) constant blocks.
            out = _call(False)
    else:
        out = _call(False)

    if group == 1:
        return out
    return out.reshape(NG, C, group, T).transpose(0, 2, 1, 3).reshape(N, C, T)


# ----------------------------- reference (plain JAX) ------------------------
def _conv1d_ref(x, w, b, dil):
    out = jax.lax.conv_general_dilated(
        x, w, window_strides=(1,), padding=[(dil, dil)],
        rhs_dilation=(dil,), dimension_numbers=("NCH", "OIH", "NCH"))
    return out + b[None, :, None]


def res_stack_ref(x, W, B):
    h = x
    for i in range(4):
        d = 3 ** i
        y = jnp.where(h >= 0, h, NEG_SLOPE * h)
        y = _conv1d_ref(y, W[2 * i], B[2 * i], d)
        y = jnp.where(y >= 0, y, NEG_SLOPE * y)
        y = _conv1d_ref(y, W[2 * i + 1], B[2 * i + 1], 1)
        h = h + y
    return h


if __name__ == "__main__":
    N, C, T = 4, 8, 128

    key = jax.random.PRNGKey(0)
    kx, kv, kg, kb = jax.random.split(key, 4)

    # Deterministic weight_norm parameterization: w = g * v / ||v||
    # (norm over (in_channels, kernel) per output channel, torch default dim=0)
    v = jax.random.normal(kv, (8, C, C, 3), jnp.float32) * 0.1
    g = jax.random.uniform(kg, (8, C), jnp.float32, minval=0.5, maxval=1.5)
    norm = jnp.sqrt(jnp.sum(v * v, axis=(2, 3), keepdims=True))
    W = v / norm * g[:, :, None, None]        # (8, C, C, 3) effective weights
    B = jax.random.normal(kb, (8, C), jnp.float32) * 0.1

    x = jax.random.normal(kx, (N, C, T), jnp.float32)

    ref = res_stack_ref(x, W, B)

    # f32 MXU-operand verification path: must match the f32 reference tightly.
    out_f32 = jax.block_until_ready(
        res_stack_pallas(x, W, B, mxu_dtype=jnp.float32))
    assert out_f32.shape == ref.shape and out_f32.dtype == ref.dtype
    err_f32 = float(jnp.max(jnp.abs(out_f32 - ref)))
    assert err_f32 < 1e-4, f"f32 path mismatch vs reference: {err_f32}"

    # bf16 MXU-operand default (perf config): loose sanity bound vs f32 ref.
    out_bf16 = jax.block_until_ready(res_stack_pallas(x, W, B))
    rel_bf16 = float(jnp.max(jnp.abs(out_bf16 - ref)) /
                     (jnp.max(jnp.abs(ref)) + 1e-6))
    assert rel_bf16 < 0.2, f"bf16 path sanity check failed: {rel_bf16}"

    print("KERNEL_OK")
</pallas_src>

<mosaic_0001>
module attributes {stable_mosaic.version = 11 : i64} {
  func.func @res_stack_kernel(%arg0: i32, %arg1: memref<1x8x128xf32, #tpu.memory_space<vmem>>, %arg2: memref<8x8x24xf32, #tpu.memory_space<vmem>>, %arg3: memref<8x8x1xf32, #tpu.memory_space<vmem>>, %arg4: memref<1x8x128xf32, #tpu.memory_space<vmem>>, %arg5: memref<24x128xf32, #tpu.memory_space<vmem>>) attributes {dimension_semantics = [#tpu.dimension_semantics<parallel>], iteration_bounds = array<i64: 4>, scalar_prefetch = 0 : i64, scratch_operands = 1 : i64, tpu.core_type = #tpu.core_type<tc>, window_params = [{transform_indices = @transform_0, window_bounds = array<i64: 1, 8, 128>}, {pipeline_mode = #tpu.pipeline_mode<synchronous>, transform_indices = @transform_1, window_bounds = array<i64: 8, 8, 24>}, {pipeline_mode = #tpu.pipeline_mode<synchronous>, transform_indices = @transform_2, window_bounds = array<i64: 8, 8, 1>}, {transform_indices = @transform_3, window_bounds = array<i64: 1, 8, 128>}]} {
    %c0 = arith.constant 0 : index
    %c0_0 = arith.constant 0 : index
    %c0_1 = arith.constant 0 : index
    %0 = vector.load %arg1[%c0, %c0_0, %c0_1] : memref<1x8x128xf32, #tpu.memory_space<vmem>>, vector<1x8x128xf32>
    %1 = vector.shape_cast %0 : vector<1x8x128xf32> to vector<8x128xf32>
    %2 = tpu.iota {dimensions = array<i32: 1>} : vector<1x128xi32>
    %c128_i32 = arith.constant 128 : i32
    %c0_i32 = arith.constant 0 : i32
    %3 = arith.cmpi eq, %c128_i32, %c0_i32 : i32
    %c1_i32 = arith.constant 1 : i32
    %4 = arith.select %3, %c1_i32, %c128_i32 : i32
    %5 = vector.broadcast %4 : i32 to vector<1x128xi32>
    %6 = arith.remsi %2, %5 : vector<1x128xi32>
    %c0_i32_2 = arith.constant 0 : i32
    %7 = vector.broadcast %c0_i32_2 : i32 to vector<1x128xi32>
    %8 = arith.cmpi ne, %6, %7 : vector<1x128xi32>
    %c0_i32_3 = arith.constant 0 : i32
    %9 = vector.broadcast %c0_i32_3 : i32 to vector<1x128xi32>
    %10 = arith.cmpi slt, %6, %9 : vector<1x128xi32>
    %c0_i32_4 = arith.constant 0 : i32
    %11 = arith.cmpi slt, %4, %c0_i32_4 : i32
    %12 = vector.broadcast %11 : i1 to vector<1x128xi1>
    %13 = vector.broadcast %12 : vector<1x128xi1> to vector<1x128xi1>
    %14 = arith.xori %10, %13 : vector<1x128xi1>
    %15 = arith.andi %14, %8 : vector<1x128xi1>
    %16 = vector.broadcast %4 : i32 to vector<1x128xi32>
    %17 = arith.addi %6, %16 : vector<1x128xi32>
    %18 = arith.select %15, %17, %6 : vector<1x128xi1>, vector<1x128xi32>
    %cst = arith.constant 0.00999999977 : f32
    %19 = vector.broadcast %cst : f32 to vector<8x128xf32>
    %20 = arith.mulf %19, %1 : vector<8x128xf32>
    %21 = arith.maximumf %1, %20 : vector<8x128xf32>
    %c1_i32_5 = arith.constant 1 : i32
    %22 = vector.broadcast %c1_i32_5 : i32 to vector<1x128xi32>
    %23 = arith.cmpi sge, %18, %22 : vector<1x128xi32>
    %c127_i32 = arith.constant 127 : i32
    %24 = vector.broadcast %c127_i32 : i32 to vector<1x128xi32>
    %25 = arith.cmpi slt, %18, %24 : vector<1x128xi32>
    %c1_i32_6 = arith.constant 1 : i32
    %26 = tpu.dynamic_rotate %21 by %c1_i32_6 dim 1 : vector<8x128xf32>, i32 -> vector<8x128xf32>
    %cst_7 = arith.constant 0.000000e+00 : f32
    %27 = vector.shape_cast %23 : vector<1x128xi1> to vector<1x128xi1>
    %28 = vector.broadcast %27 : vector<1x128xi1> to vector<8x128xi1>
    %29 = vector.broadcast %cst_7 : f32 to vector<8x128xf32>
    %30 = arith.select %28, %26, %29 : vector<8x128xi1>, vector<8x128xf32>
    %c127_i32_8 = arith.constant 127 : i32
    %31 = tpu.dynamic_rotate %21 by %c127_i32_8 dim 1 : vector<8x128xf32>, i32 -> vector<8x128xf32>
    %cst_9 = arith.constant 0.000000e+00 : f32
    %32 = vector.shape_cast %25 : vector<1x128xi1> to vector<1x128xi1>
    %33 = vector.broadcast %32 : vector<1x128xi1> to vector<8x128xi1>
    %34 = vector.broadcast %cst_9 : f32 to vector<8x128xf32>
    %35 = arith.select %33, %31, %34 : vector<8x128xi1>, vector<8x128xf32>
    %c0_10 = arith.constant 0 : index
    %c0_11 = arith.constant 0 : index
    %36 = vector.load %arg5[%c0_10, %c0_11] : memref<24x128xf32, #tpu.memory_space<vmem>>, vector<8x128xf32>
    tpu.vector_store %arg5[%c0_10, %c0_11], %30 {strides = array<i32>} : memref<24x128xf32, #tpu.memory_space<vmem>>, vector<8x128xf32>,
    %c8 = arith.constant 8 : index
    %c0_12 = arith.constant 0 : index
    %37 = vector.load %arg5[%c8, %c0_12] : memref<24x128xf32, #tpu.memory_space<vmem>>, vector<8x128xf32>
    tpu.vector_store %arg5[%c8, %c0_12], %21 {strides = array<i32>} : memref<24x128xf32, #tpu.memory_space<vmem>>, vector<8x128xf32>,
    %c16 = arith.constant 16 : index
    %c0_13 = arith.constant 0 : index
    %38 = vector.load %arg5[%c16, %c0_13] : memref<24x128xf32, #tpu.memory_space<vmem>>, vector<8x128xf32>
    tpu.vector_store %arg5[%c16, %c0_13], %35 {strides = array<i32>} : memref<24x128xf32, #tpu.memory_space<vmem>>, vector<8x128xf32>,
    %c0_14 = arith.constant 0 : index
    %c0_15 = arith.constant 0 : index
    %39 = vector.load %arg5[%c0_14, %c0_15] : memref<24x128xf32, #tpu.memory_space<vmem>>, vector<24x128xf32>
    %c0_16 = arith.constant 0 : index
    %c0_17 = arith.constant 0 : index
    %c0_18 = arith.constant 0 : index
    %40 = vector.load %arg2[%c0_16, %c0_17, %c0_18] : memref<8x8x24xf32, #tpu.memory_space<vmem>>, vector<1x8x24xf32>
    %41 = vector.shape_cast %40 : vector<1x8x24xf32> to vector<8x24xf32>
    %cst_19 = arith.constant dense<0.000000e+00> : vector<8x128xf32>
    %42 = tpu.matmul %41, %39, %cst_19 {dimension_numbers = #tpu.dot_dimension_numbers<[1], [0], [0], [1], [0, 0, 1, 1], [], []>} : vector<8x24xf32>, vector<24x128xf32>, vector<8x128xf32> -> vector<8x128xf32>
    %c0_20 = arith.constant 0 : index
    %c0_21 = arith.constant 0 : index
    %c0_22 = arith.constant 0 : index
    %43 = vector.load %arg3[%c0_20, %c0_21, %c0_22] : memref<8x8x1xf32, #tpu.memory_space<vmem>>, vector<1x8x1xf32>
    %44 = vector.shape_cast %43 : vector<1x8x1xf32> to vector<8x1xf32>
    %45 = vector.broadcast %44 : vector<8x1xf32> to vector<8x128xf32>
    %46 = arith.addf %42, %45 : vector<8x128xf32>
    %cst_23 = arith.constant 0.00999999977 : f32
    %47 = vector.broadcast %cst_23 : f32 to vector<8x128xf32>
    %48 = arith.mulf %47, %46 : vector<8x128xf32>
    %49 = arith.maximumf %46, %48 : vector<8x128xf32>
    %c1_i32_24 = arith.constant 1 : i32
    %50 = vector.broadcast %c1_i32_24 : i32 to vector<1x128xi32>
    %51 = arith.cmpi sge, %18, %50 : vector<1x128xi32>
    %c127_i32_25 = arith.constant 127 : i32
    %52 = vector.broadcast %c127_i32_25 : i32 to vector<1x128xi32>
    %53 = arith.cmpi slt, %18, %52 : vector<1x128xi32>
    %c1_i32_26 = arith.constant 1 : i32
    %54 = tpu.dynamic_rotate %49 by %c1_i32_26 dim 1 : vector<8x128xf32>, i32 -> vector<8x128xf32>
    %cst_27 = arith.constant 0.000000e+00 : f32
    %55 = vector.shape_cast %51 : vector<1x128xi1> to vector<1x128xi1>
    %56 = vector.broadcast %55 : vector<1x128xi1> to vector<8x128xi1>
    %57 = vector.broadcast %cst_27 : f32 to vector<8x128xf32>
    %58 = arith.select %56, %54, %57 : vector<8x128xi1>, vector<8x128xf32>
    %c127_i32_28 = arith.constant 127 : i32
    %59 = tpu.dynamic_rotate %49 by %c127_i32_28 dim 1 : vector<8x128xf32>, i32 -> vector<8x128xf32>
    %cst_29 = arith.constant 0.000000e+00 : f32
    %60 = vector.shape_cast %53 : vector<1x128xi1> to vector<1x128xi1>
    %61 = vector.broadcast %60 : vector<1x128xi1> to vector<8x128xi1>
    %62 = vector.broadcast %cst_29 : f32 to vector<8x128xf32>
    %63 = arith.select %61, %59, %62 : vector<8x128xi1>, vector<8x128xf32>
    %c0_30 = arith.constant 0 : index
    %c0_31 = arith.constant 0 : index
    %64 = vector.load %arg5[%c0_30, %c0_31] : memref<24x128xf32, #tpu.memory_space<vmem>>, vector<8x128xf32>
    tpu.vector_store %arg5[%c0_30, %c0_31], %58 {strides = array<i32>} : memref<24x128xf32, #tpu.memory_space<vmem>>, vector<8x128xf32>,
    %c8_32 = arith.constant 8 : index
    %c0_33 = arith.constant 0 : index
    %65 = vector.load %arg5[%c8_32, %c0_33] : memref<24x128xf32, #tpu.memory_space<vmem>>, vector<8x128xf32>
    tpu.vector_store %arg5[%c8_32, %c0_33], %49 {strides = array<i32>} : memref<24x128xf32, #tpu.memory_space<vmem>>, vector<8x128xf32>,
    %c16_34 = arith.constant 16 : index
    %c0_35 = arith.constant 0 : index
    %66 = vector.load %arg5[%c16_34, %c0_35] : memref<24x128xf32, #tpu.memory_space<vmem>>, vector<8x128xf32>
    tpu.vector_store %arg5[%c16_34, %c0_35], %63 {strides = array<i32>} : memref<24x128xf32, #tpu.memory_space<vmem>>, vector<8x128xf32>,
    %c0_36 = arith.constant 0 : index
    %c0_37 = arith.constant 0 : index
    %67 = vector.load %arg5[%c0_36, %c0_37] : memref<24x128xf32, #tpu.memory_space<vmem>>, vector<24x128xf32>
    %c1 = arith.constant 1 : index
    %c0_38 = arith.constant 0 : index
    %c0_39 = arith.constant 0 : index
    %68 = vector.load %arg2[%c1, %c0_38, %c0_39] : memref<8x8x24xf32, #tpu.memory_space<vmem>>, vector<1x8x24xf32>
    %69 = vector.shape_cast %68 : vector<1x8x24xf32> to vector<8x24xf32>
    %cst_40 = arith.constant dense<0.000000e+00> : vector<8x128xf32>
    %70 = tpu.matmul %69, %67, %cst_40 {dimension_numbers = #tpu.dot_dimension_numbers<[1], [0], [0], [1], [0, 0, 1, 1], [], []>} : vector<8x24xf32>, vector<24x128xf32>, vector<8x128xf32> -> vector<8x128xf32>
    %c1_41 = arith.constant 1 : index
    %c0_42 = arith.constant 0 : index
    %c0_43 = arith.constant 0 : index
    %71 = vector.load %arg3[%c1_41, %c0_42, %c0_43] : memref<8x8x1xf32, #tpu.memory_space<vmem>>, vector<1x8x1xf32>
    %72 = vector.shape_cast %71 : vector<1x8x1xf32> to vector<8x1xf32>
    %73 = vector.broadcast %72 : vector<8x1xf32> to vector<8x128xf32>
    %74 = arith.addf %70, %73 : vector<8x128xf32>
    %75 = arith.addf %1, %74 : vector<8x128xf32>
    %cst_44 = arith.constant 0.00999999977 : f32
    %76 = vector.broadcast %cst_44 : f32 to vector<8x128xf32>
    %77 = arith.mulf %76, %75 : vector<8x128xf32>
    %78 = arith.maximumf %75, %77 : vector<8x128xf32>
    %c3_i32 = arith.constant 3 : i32
    %79 = vector.broadcast %c3_i32 : i32 to vector<1x128xi32>
    %80 = arith.cmpi sge, %18, %79 : vector<1x128xi32>
    %c125_i32 = arith.constant 125 : i32
    %81 = vector.broadcast %c125_i32 : i32 to vector<1x128xi32>
    %82 = arith.cmpi slt, %18, %81 : vector<1x128xi32>
    %c3_i32_45 = arith.constant 3 : i32
    %83 = tpu.dynamic_rotate %78 by %c3_i32_45 dim 1 : vector<8x128xf32>, i32 -> vector<8x128xf32>
    %cst_46 = arith.constant 0.000000e+00 : f32
    %84 = vector.shape_cast %80 : vector<1x128xi1> to vector<1x128xi1>
    %85 = vector.broadcast %84 : vector<1x128xi1> to vector<8x128xi1>
    %86 = vector.broadcast %cst_46 : f32 to vector<8x128xf32>
    %87 = arith.select %85, %83, %86 : vector<8x128xi1>, vector<8x128xf32>
    %c125_i32_47 = arith.constant 125 : i32
    %88 = tpu.dynamic_rotate %78 by %c125_i32_47 dim 1 : vector<8x128xf32>, i32 -> vector<8x128xf32>
    %cst_48 = arith.constant 0.000000e+00 : f32
    %89 = vector.shape_cast %82 : vector<1x128xi1> to vector<1x128xi1>
    %90 = vector.broadcast %89 : vector<1x128xi1> to vector<8x128xi1>
    %91 = vector.broadcast %cst_48 : f32 to vector<8x128xf32>
    %92 = arith.select %90, %88, %91 : vector<8x128xi1>, vector<8x128xf32>
    %c0_49 = arith.constant 0 : index
    %c0_50 = arith.constant 0 : index
    %93 = vector.load %arg5[%c0_49, %c0_50] : memref<24x128xf32, #tpu.memory_space<vmem>>, vector<8x128xf32>
    tpu.vector_store %arg5[%c0_49, %c0_50], %87 {strides = array<i32>} : memref<24x128xf32, #tpu.memory_space<vmem>>, vector<8x128xf32>,
    %c8_51 = arith.constant 8 : index
    %c0_52 = arith.constant 0 : index
    %94 = vector.load %arg5[%c8_51, %c0_52] : memref<24x128xf32, #tpu.memory_space<vmem>>, vector<8x128xf32>
    tpu.vector_store %arg5[%c8_51, %c0_52], %78 {strides = array<i32>} : memref<24x128xf32, #tpu.memory_space<vmem>>, vector<8x128xf32>,
    %c16_53 = arith.constant 16 : index
    %c0_54 = arith.constant 0 : index
    %95 = vector.load %arg5[%c16_53, %c0_54] : memref<24x128xf32, #tpu.memory_space<vmem>>, vector<8x128xf32>
    tpu.vector_store %arg5[%c16_53, %c0_54], %92 {strides = array<i32>} : memref<24x128xf32, #tpu.memory_space<vmem>>, vector<8x128xf32>,
    %c0_55 = arith.constant 0 : index
    %c0_56 = arith.constant 0 : index
    %96 = vector.load %arg5[%c0_55, %c0_56] : memref<24x128xf32, #tpu.memory_space<vmem>>, vector<24x128xf32>
    %c2 = arith.constant 2 : index
    %c0_57 = arith.constant 0 : index
    %c0_58 = arith.constant 0 : index
    %97 = vector.load %arg2[%c2, %c0_57, %c0_58] : memref<8x8x24xf32, #tpu.memory_space<vmem>>, vector<1x8x24xf32>
    %98 = vector.shape_cast %97 : vector<1x8x24xf32> to vector<8x24xf32>
    %cst_59 = arith.constant dense<0.000000e+00> : vector<8x128xf32>
    %99 = tpu.matmul %98, %96, %cst_59 {dimension_numbers = #tpu.dot_dimension_numbers<[1], [0], [0], [1], [0, 0, 1, 1], [], []>} : vector<8x24xf32>, vector<24x128xf32>, vector<8x128xf32> -> vector<8x128xf32>
    %c2_60 = arith.constant 2 : index
    %c0_61 = arith.constant 0 : index
    %c0_62 = arith.constant 0 : index
    %100 = vector.load %arg3[%c2_60, %c0_61, %c0_62] : memref<8x8x1xf32, #tpu.memory_space<vmem>>, vector<1x8x1xf32>
    %101 = vector.shape_cast %100 : vector<1x8x1xf32> to vector<8x1xf32>
    %102 = vector.broadcast %101 : vector<8x1xf32> to vector<8x128xf32>
    %103 = arith.addf %99, %102 : vector<8x128xf32>
    %cst_63 = arith.constant 0.00999999977 : f32
    %104 = vector.broadcast %cst_63 : f32 to vector<8x128xf32>
    %105 = arith.mulf %104, %103 : vector<8x128xf32>
    %106 = arith.maximumf %103, %105 : vector<8x128xf32>
    %c1_i32_64 = arith.constant 1 : i32
    %107 = vector.broadcast %c1_i32_64 : i32 to vector<1x128xi32>
    %108 = arith.cmpi sge, %18, %107 : vector<1x128xi32>
    %c127_i32_65 = arith.constant 127 : i32
    %109 = vector.broadcast %c127_i32_65 : i32 to vector<1x128xi32>
    %110 = arith.cmpi slt, %18, %109 : vector<1x128xi32>
    %c1_i32_66 = arith.constant 1 : i32
    %111 = tpu.dynamic_rotate %106 by %c1_i32_66 dim 1 : vector<8x128xf32>, i32 -> vector<8x128xf32>
    %cst_67 = arith.constant 0.000000e+00 : f32
    %112 = vector.shape_cast %108 : vector<1x128xi1> to vector<1x128xi1>
    %113 = vector.broadcast %112 : vector<1x128xi1> to vector<8x128xi1>
    %114 = vector.broadcast %cst_67 : f32 to vector<8x128xf32>
    %115 = arith.select %113, %111, %114 : vector<8x128xi1>, vector<8x128xf32>
    %c127_i32_68 = arith.constant 127 : i32
    %116 = tpu.dynamic_rotate %106 by %c127_i32_68 dim 1 : vector<8x128xf32>, i32 -> vector<8x128xf32>
    %cst_69 = arith.constant 0.000000e+00 : f32
    %117 = vector.shape_cast %110 : vector<1x128xi1> to vector<1x128xi1>
    %118 = vector.broadcast %117 : vector<1x128xi1> to vector<8x128xi1>
    %119 = vector.broadcast %cst_69 : f32 to vector<8x128xf32>
    %120 = arith.select %118, %116, %119 : vector<8x128xi1>, vector<8x128xf32>
    %c0_70 = arith.constant 0 : index
    %c0_71 = arith.constant 0 : index
    %121 = vector.load %arg5[%c0_70, %c0_71] : memref<24x128xf32, #tpu.memory_space<vmem>>, vector<8x128xf32>
    tpu.vector_store %arg5[%c0_70, %c0_71], %115 {strides = array<i32>} : memref<24x128xf32, #tpu.memory_space<vmem>>, vector<8x128xf32>,
    %c8_72 = arith.constant 8 : index
    %c0_73 = arith.constant 0 : index
    %122 = vector.load %arg5[%c8_72, %c0_73] : memref<24x128xf32, #tpu.memory_space<vmem>>, vector<8x128xf32>
    tpu.vector_store %arg5[%c8_72, %c0_73], %106 {strides = array<i32>} : memref<24x128xf32, #tpu.memory_space<vmem>>, vector<8x128xf32>,
    %c16_74 = arith.constant 16 : index
    %c0_75 = arith.constant 0 : index
    %123 = vector.load %arg5[%c16_74, %c0_75] : memref<24x128xf32, #tpu.memory_space<vmem>>, vector<8x128xf32>
    tpu.vector_store %arg5[%c16_74, %c0_75], %120 {strides = array<i32>} : memref<24x128xf32, #tpu.memory_space<vmem>>, vector<8x128xf32>,
    %c0_76 = arith.constant 0 : index
    %c0_77 = arith.constant 0 : index
    %124 = vector.load %arg5[%c0_76, %c0_77] : memref<24x128xf32, #tpu.memory_space<vmem>>, vector<24x128xf32>
    %c3 = arith.constant 3 : index
    %c0_78 = arith.constant 0 : index
    %c0_79 = arith.constant 0 : index
    %125 = vector.load %arg2[%c3, %c0_78, %c0_79] : memref<8x8x24xf32, #tpu.memory_space<vmem>>, vector<1x8x24xf32>
    %126 = vector.shape_cast %125 : vector<1x8x24xf32> to vector<8x24xf32>
    %cst_80 = arith.constant dense<0.000000e+00> : vector<8x128xf32>
    %127 = tpu.matmul %126, %124, %cst_80 {dimension_numbers = #tpu.dot_dimension_numbers<[1], [0], [0], [1], [0, 0, 1, 1], [], []>} : vector<8x24xf32>, vector<24x128xf32>, vector<8x128xf32> -> vector<8x128xf32>
    %c3_81 = arith.constant 3 : index
    %c0_82 = arith.constant 0 : index
    %c0_83 = arith.constant 0 : index
    %128 = vector.load %arg3[%c3_81, %c0_82, %c0_83] : memref<8x8x1xf32, #tpu.memory_space<vmem>>, vector<1x8x1xf32>
    %129 = vector.shape_cast %128 : vector<1x8x1xf32> to vector<8x1xf32>
    %130 = vector.broadcast %129 : vector<8x1xf32> to vector<8x128xf32>
    %131 = arith.addf %127, %130 : vector<8x128xf32>
    %132 = arith.addf %75, %131 : vector<8x128xf32>
    %cst_84 = arith.constant 0.00999999977 : f32
    %133 = vector.broadcast %cst_84 : f32 to vector<8x128xf32>
    %134 = arith.mulf %133, %132 : vector<8x128xf32>
    %135 = arith.maximumf %132, %134 : vector<8x128xf32>
    %c9_i32 = arith.constant 9 : i32
    %136 = vector.broadcast %c9_i32 : i32 to vector<1x128xi32>
    %137 = arith.cmpi sge, %18, %136 : vector<1x128xi32>
    %c119_i32 = arith.constant 119 : i32
    %138 = vector.broadcast %c119_i32 : i32 to vector<1x128xi32>
    %139 = arith.cmpi slt, %18, %138 : vector<1x128xi32>
    %c9_i32_85 = arith.constant 9 : i32
    %140 = tpu.dynamic_rotate %135 by %c9_i32_85 dim 1 : vector<8x128xf32>, i32 -> vector<8x128xf32>
    %cst_86 = arith.constant 0.000000e+00 : f32
    %141 = vector.shape_cast %137 : vector<1x128xi1> to vector<1x128xi1>
    %142 = vector.broadcast %141 : vector<1x128xi1> to vector<8x128xi1>
    %143 = vector.broadcast %cst_86 : f32 to vector<8x128xf32>
    %144 = arith.select %142, %140, %143 : vector<8x128xi1>, vector<8x128xf32>
    %c119_i32_87 = arith.constant 119 : i32
    %145 = tpu.dynamic_rotate %135 by %c119_i32_87 dim 1 : vector<8x128xf32>, i32 -> vector<8x128xf32>
    %cst_88 = arith.constant 0.000000e+00 : f32
    %146 = vector.shape_cast %139 : vector<1x128xi1> to vector<1x128xi1>
    %147 = vector.broadcast %146 : vector<1x128xi1> to vector<8x128xi1>
    %148 = vector.broadcast %cst_88 : f32 to vector<8x128xf32>
    %149 = arith.select %147, %145, %148 : vector<8x128xi1>, vector<8x128xf32>
    %c0_89 = arith.constant 0 : index
    %c0_90 = arith.constant 0 : index
    %150 = vector.load %arg5[%c0_89, %c0_90] : memref<24x128xf32, #tpu.memory_space<vmem>>, vector<8x128xf32>
    tpu.vector_store %arg5[%c0_89, %c0_90], %144 {strides = array<i32>} : memref<24x128xf32, #tpu.memory_space<vmem>>, vector<8x128xf32>,
    %c8_91 = arith.constant 8 : index
    %c0_92 = arith.constant 0 : index
    %151 = vector.load %arg5[%c8_91, %c0_92] : memref<24x128xf32, #tpu.memory_space<vmem>>, vector<8x128xf32>
    tpu.vector_store %arg5[%c8_91, %c0_92], %135 {strides = array<i32>} : memref<24x128xf32, #tpu.memory_space<vmem>>, vector<8x128xf32>,
    %c16_93 = arith.constant 16 : index
    %c0_94 = arith.constant 0 : index
    %152 = vector.load %arg5[%c16_93, %c0_94] : memref<24x128xf32, #tpu.memory_space<vmem>>, vector<8x128xf32>
    tpu.vector_store %arg5[%c16_93, %c0_94], %149 {strides = array<i32>} : memref<24x128xf32, #tpu.memory_space<vmem>>, vector<8x128xf32>,
    %c0_95 = arith.constant 0 : index
    %c0_96 = arith.constant 0 : index
    %153 = vector.load %arg5[%c0_95, %c0_96] : memref<24x128xf32, #tpu.memory_space<vmem>>, vector<24x128xf32>
    %c4 = arith.constant 4 : index
    %c0_97 = arith.constant 0 : index
    %c0_98 = arith.constant 0 : index
    %154 = vector.load %arg2[%c4, %c0_97, %c0_98] : memref<8x8x24xf32, #tpu.memory_space<vmem>>, vector<1x8x24xf32>
    %155 = vector.shape_cast %154 : vector<1x8x24xf32> to vector<8x24xf32>
    %cst_99 = arith.constant dense<0.000000e+00> : vector<8x128xf32>
    %156 = tpu.matmul %155, %153, %cst_99 {dimension_numbers = #tpu.dot_dimension_numbers<[1], [0], [0], [1], [0, 0, 1, 1], [], []>} : vector<8x24xf32>, vector<24x128xf32>, vector<8x128xf32> -> vector<8x128xf32>
    %c4_100 = arith.constant 4 : index
    %c0_101 = arith.constant 0 : index
    %c0_102 = arith.constant 0 : index
    %157 = vector.load %arg3[%c4_100, %c0_101, %c0_102] : memref<8x8x1xf32, #tpu.memory_space<vmem>>, vector<1x8x1xf32>
    %158 = vector.shape_cast %157 : vector<1x8x1xf32> to vector<8x1xf32>
    %159 = vector.broadcast %158 : vector<8x1xf32> to vector<8x128xf32>
    %160 = arith.addf %156, %159 : vector<8x128xf32>
    %cst_103 = arith.constant 0.00999999977 : f32
    %161 = vector.broadcast %cst_103 : f32 to vector<8x128xf32>
    %162 = arith.mulf %161, %160 : vector<8x128xf32>
    %163 = arith.maximumf %160, %162 : vector<8x128xf32>
    %c1_i32_104 = arith.constant 1 : i32
    %164 = vector.broadcast %c1_i32_104 : i32 to vector<1x128xi32>
    %165 = arith.cmpi sge, %18, %164 : vector<1x128xi32>
    %c127_i32_105 = arith.constant 127 : i32
    %166 = vector.broadcast %c127_i32_105 : i32 to vector<1x128xi32>
    %167 = arith.cmpi slt, %18, %166 : vector<1x128xi32>
    %c1_i32_106 = arith.constant 1 : i32
    %168 = tpu.dynamic_rotate %163 by %c1_i32_106 dim 1 : vector<8x128xf32>, i32 -> vector<8x128xf32>
    %cst_107 = arith.constant 0.000000e+00 : f32
    %169 = vector.shape_cast %165 : vector<1x128xi1> to vector<1x128xi1>
    %170 = vector.broadcast %169 : vector<1x128xi1> to vector<8x128xi1>
    %171 = vector.broadcast %cst_107 : f32 to vector<8x128xf32>
    %172 = arith.select %170, %168, %171 : vector<8x128xi1>, vector<8x128xf32>
    %c127_i32_108 = arith.constant 127 : i32
    %173 = tpu.dynamic_rotate %163 by %c127_i32_108 dim 1 : vector<8x128xf32>, i32 -> vector<8x128xf32>
    %cst_109 = arith.constant 0.000000e+00 : f32
    %174 = vector.shape_cast %167 : vector<1x128xi1> to vector<1x128xi1>
    %175 = vector.broadcast %174 : vector<1x128xi1> to vector<8x128xi1>
    %176 = vector.broadcast %cst_109 : f32 to vector<8x128xf32>
    %177 = arith.select %175, %173, %176 : vector<8x128xi1>, vector<8x128xf32>
    %c0_110 = arith.constant 0 : index
    %c0_111 = arith.constant 0 : index
    %178 = vector.load %arg5[%c0_110, %c0_111] : memref<24x128xf32, #tpu.memory_space<vmem>>, vector<8x128xf32>
    tpu.vector_store %arg5[%c0_110, %c0_111], %172 {strides = array<i32>} : memref<24x128xf32, #tpu.memory_space<vmem>>, vector<8x128xf32>,
    %c8_112 = arith.constant 8 : index
    %c0_113 = arith.constant 0 : index
    %179 = vector.load %arg5[%c8_112, %c0_113] : memref<24x128xf32, #tpu.memory_space<vmem>>, vector<8x128xf32>
    tpu.vector_store %arg5[%c8_112, %c0_113], %163 {strides = array<i32>} : memref<24x128xf32, #tpu.memory_space<vmem>>, vector<8x128xf32>,
    %c16_114 = arith.constant 16 : index
    %c0_115 = arith.constant 0 : index
    %180 = vector.load %arg5[%c16_114, %c0_115] : memref<24x128xf32, #tpu.memory_space<vmem>>, vector<8x128xf32>
    tpu.vector_store %arg5[%c16_114, %c0_115], %177 {strides = array<i32>} : memref<24x128xf32, #tpu.memory_space<vmem>>, vector<8x128xf32>,
    %c0_116 = arith.constant 0 : index
    %c0_117 = arith.constant 0 : index
    %181 = vector.load %arg5[%c0_116, %c0_117] : memref<24x128xf32, #tpu.memory_space<vmem>>, vector<24x128xf32>
    %c5 = arith.constant 5 : index
    %c0_118 = arith.constant 0 : index
    %c0_119 = arith.constant 0 : index
    %182 = vector.load %arg2[%c5, %c0_118, %c0_119] : memref<8x8x24xf32, #tpu.memory_space<vmem>>, vector<1x8x24xf32>
    %183 = vector.shape_cast %182 : vector<1x8x24xf32> to vector<8x24xf32>
    %cst_120 = arith.constant dense<0.000000e+00> : vector<8x128xf32>
    %184 = tpu.matmul %183, %181, %cst_120 {dimension_numbers = #tpu.dot_dimension_numbers<[1], [0], [0], [1], [0, 0, 1, 1], [], []>} : vector<8x24xf32>, vector<24x128xf32>, vector<8x128xf32> -> vector<8x128xf32>
    %c5_121 = arith.constant 5 : index
    %c0_122 = arith.constant 0 : index
    %c0_123 = arith.constant 0 : index
    %185 = vector.load %arg3[%c5_121, %c0_122, %c0_123] : memref<8x8x1xf32, #tpu.memory_space<vmem>>, vector<1x8x1xf32>
    %186 = vector.shape_cast %185 : vector<1x8x1xf32> to vector<8x1xf32>
    %187 = vector.broadcast %186 : vector<8x1xf32> to vector<8x128xf32>
    %188 = arith.addf %184, %187 : vector<8x128xf32>
    %189 = arith.addf %132, %188 : vector<8x128xf32>
    %cst_124 = arith.constant 0.00999999977 : f32
    %190 = vector.broadcast %cst_124 : f32 to vector<8x128xf32>
    %191 = arith.mulf %190, %189 : vector<8x128xf32>
    %192 = arith.maximumf %189, %191 : vector<8x128xf32>
    %c27_i32 = arith.constant 27 : i32
    %193 = vector.broadcast %c27_i32 : i32 to vector<1x128xi32>
    %194 = arith.cmpi sge, %18, %193 : vector<1x128xi32>
    %c101_i32 = arith.constant 101 : i32
    %195 = vector.broadcast %c101_i32 : i32 to vector<1x128xi32>
    %196 = arith.cmpi slt, %18, %195 : vector<1x128xi32>
    %c27_i32_125 = arith.constant 27 : i32
    %197 = tpu.dynamic_rotate %192 by %c27_i32_125 dim 1 : vector<8x128xf32>, i32 -> vector<8x128xf32>
    %cst_126 = arith.constant 0.000000e+00 : f32
    %198 = vector.shape_cast %194 : vector<1x128xi1> to vector<1x128xi1>
    %199 = vector.broadcast %198 : vector<1x128xi1> to vector<8x128xi1>
    %200 = vector.broadcast %cst_126 : f32 to vector<8x128xf32>
    %201 = arith.select %199, %197, %200 : vector<8x128xi1>, vector<8x128xf32>
    %c101_i32_127 = arith.constant 101 : i32
    %202 = tpu.dynamic_rotate %192 by %c101_i32_127 dim 1 : vector<8x128xf32>, i32 -> vector<8x128xf32>
    %cst_128 = arith.constant 0.000000e+00 : f32
    %203 = vector.shape_cast %196 : vector<1x128xi1> to vector<1x128xi1>
    %204 = vector.broadcast %203 : vector<1x128xi1> to vector<8x128xi1>
    %205 = vector.broadcast %cst_128 : f32 to vector<8x128xf32>
    %206 = arith.select %204, %202, %205 : vector<8x128xi1>, vector<8x128xf32>
    %c0_129 = arith.constant 0 : index
    %c0_130 = arith.constant 0 : index
    %207 = vector.load %arg5[%c0_129, %c0_130] : memref<24x128xf32, #tpu.memory_space<vmem>>, vector<8x128xf32>
    tpu.vector_store %arg5[%c0_129, %c0_130], %201 {strides = array<i32>} : memref<24x128xf32, #tpu.memory_space<vmem>>, vector<8x128xf32>,
    %c8_131 = arith.constant 8 : index
    %c0_132 = arith.constant 0 : index
    %208 = vector.load %arg5[%c8_131, %c0_132] : memref<24x128xf32, #tpu.memory_space<vmem>>, vector<8x128xf32>
    tpu.vector_store %arg5[%c8_131, %c0_132], %192 {strides = array<i32>} : memref<24x128xf32, #tpu.memory_space<vmem>>, vector<8x128xf32>,
    %c16_133 = arith.constant 16 : index
    %c0_134 = arith.constant 0 : index
    %209 = vector.load %arg5[%c16_133, %c0_134] : memref<24x128xf32, #tpu.memory_space<vmem>>, vector<8x128xf32>
    tpu.vector_store %arg5[%c16_133, %c0_134], %206 {strides = array<i32>} : memref<24x128xf32, #tpu.memory_space<vmem>>, vector<8x128xf32>,
    %c0_135 = arith.constant 0 : index
    %c0_136 = arith.constant 0 : index
    %210 = vector.load %arg5[%c0_135, %c0_136] : memref<24x128xf32, #tpu.memory_space<vmem>>, vector<24x128xf32>
    %c6 = arith.constant 6 : index
    %c0_137 = arith.constant 0 : index
    %c0_138 = arith.constant 0 : index
    %211 = vector.load %arg2[%c6, %c0_137, %c0_138] : memref<8x8x24xf32, #tpu.memory_space<vmem>>, vector<1x8x24xf32>
    %212 = vector.shape_cast %211 : vector<1x8x24xf32> to vector<8x24xf32>
    %cst_139 = arith.constant dense<0.000000e+00> : vector<8x128xf32>
    %213 = tpu.matmul %212, %210, %cst_139 {dimension_numbers = #tpu.dot_dimension_numbers<[1], [0], [0], [1], [0, 0, 1, 1], [], []>} : vector<8x24xf32>, vector<24x128xf32>, vector<8x128xf32> -> vector<8x128xf32>
    %c6_140 = arith.constant 6 : index
    %c0_141 = arith.constant 0 : index
    %c0_142 = arith.constant 0 : index
    %214 = vector.load %arg3[%c6_140, %c0_141, %c0_142] : memref<8x8x1xf32, #tpu.memory_space<vmem>>, vector<1x8x1xf32>
    %215 = vector.shape_cast %214 : vector<1x8x1xf32> to vector<8x1xf32>
    %216 = vector.broadcast %215 : vector<8x1xf32> to vector<8x128xf32>
    %217 = arith.addf %213, %216 : vector<8x128xf32>
    %cst_143 = arith.constant 0.00999999977 : f32
    %218 = vector.broadcast %cst_143 : f32 to vector<8x128xf32>
    %219 = arith.mulf %218, %217 : vector<8x128xf32>
    %220 = arith.maximumf %217, %219 : vector<8x128xf32>
    %c1_i32_144 = arith.constant 1 : i32
    %221 = vector.broadcast %c1_i32_144 : i32 to vector<1x128xi32>
    %222 = arith.cmpi sge, %18, %221 : vector<1x128xi32>
    %c127_i32_145 = arith.constant 127 : i32
    %223 = vector.broadcast %c127_i32_145 : i32 to vector<1x128xi32>
    %224 = arith.cmpi slt, %18, %223 : vector<1x128xi32>
    %c1_i32_146 = arith.constant 1 : i32
    %225 = tpu.dynamic_rotate %220 by %c1_i32_146 dim 1 : vector<8x128xf32>, i32 -> vector<8x128xf32>
    %cst_147 = arith.constant 0.000000e+00 : f32
    %226 = vector.shape_cast %222 : vector<1x128xi1> to vector<1x128xi1>
    %227 = vector.broadcast %226 : vector<1x128xi1> to vector<8x128xi1>
    %228 = vector.broadcast %cst_147 : f32 to vector<8x128xf32>
    %229 = arith.select %227, %225, %228 : vector<8x128xi1>, vector<8x128xf32>
    %c127_i32_148 = arith.constant 127 : i32
    %230 = tpu.dynamic_rotate %220 by %c127_i32_148 dim 1 : vector<8x128xf32>, i32 -> vector<8x128xf32>
    %cst_149 = arith.constant 0.000000e+00 : f32
    %231 = vector.shape_cast %224 : vector<1x128xi1> to vector<1x128xi1>
    %232 = vector.broadcast %231 : vector<1x128xi1> to vector<8x128xi1>
    %233 = vector.broadcast %cst_149 : f32 to vector<8x128xf32>
    %234 = arith.select %232, %230, %233 : vector<8x128xi1>, vector<8x128xf32>
    %c0_150 = arith.constant 0 : index
    %c0_151 = arith.constant 0 : index
    %235 = vector.load %arg5[%c0_150, %c0_151] : memref<24x128xf32, #tpu.memory_space<vmem>>, vector<8x128xf32>
    tpu.vector_store %arg5[%c0_150, %c0_151], %229 {strides = array<i32>} : memref<24x128xf32, #tpu.memory_space<vmem>>, vector<8x128xf32>,
    %c8_152 = arith.constant 8 : index
    %c0_153 = arith.constant 0 : index
    %236 = vector.load %arg5[%c8_152, %c0_153] : memref<24x128xf32, #tpu.memory_space<vmem>>, vector<8x128xf32>
    tpu.vector_store %arg5[%c8_152, %c0_153], %220 {strides = array<i32>} : memref<24x128xf32, #tpu.memory_space<vmem>>, vector<8x128xf32>,
    %c16_154 = arith.constant 16 : index
    %c0_155 = arith.constant 0 : index
    %237 = vector.load %arg5[%c16_154, %c0_155] : memref<24x128xf32, #tpu.memory_space<vmem>>, vector<8x128xf32>
    tpu.vector_store %arg5[%c16_154, %c0_155], %234 {strides = array<i32>} : memref<24x128xf32, #tpu.memory_space<vmem>>, vector<8x128xf32>,
    %c0_156 = arith.constant 0 : index
    %c0_157 = arith.constant 0 : index
    %238 = vector.load %arg5[%c0_156, %c0_157] : memref<24x128xf32, #tpu.memory_space<vmem>>, vector<24x128xf32>
    %c7 = arith.constant 7 : index
    %c0_158 = arith.constant 0 : index
    %c0_159 = arith.constant 0 : index
    %239 = vector.load %arg2[%c7, %c0_158, %c0_159] : memref<8x8x24xf32, #tpu.memory_space<vmem>>, vector<1x8x24xf32>
    %240 = vector.shape_cast %239 : vector<1x8x24xf32> to vector<8x24xf32>
    %cst_160 = arith.constant dense<0.000000e+00> : vector<8x128xf32>
    %241 = tpu.matmul %240, %238, %cst_160 {dimension_numbers = #tpu.dot_dimension_numbers<[1], [0], [0], [1], [0, 0, 1, 1], [], []>} : vector<8x24xf32>, vector<24x128xf32>, vector<8x128xf32> -> vector<8x128xf32>
    %c7_161 = arith.constant 7 : index
    %c0_162 = arith.constant 0 : index
    %c0_163 = arith.constant 0 : index
    %242 = vector.load %arg3[%c7_161, %c0_162, %c0_163] : memref<8x8x1xf32, #tpu.memory_space<vmem>>, vector<1x8x1xf32>
    %243 = vector.shape_cast %242 : vector<1x8x1xf32> to vector<8x1xf32>
    %244 = vector.broadcast %243 : vector<8x1xf32> to vector<8x128xf32>
    %245 = arith.addf %241, %244 : vector<8x128xf32>
    %246 = arith.addf %189, %245 : vector<8x128xf32>
    %c0_164 = arith.constant 0 : index
    %c0_165 = arith.constant 0 : index
    %c0_166 = arith.constant 0 : index
    %247 = vector.load %arg4[%c0_164, %c0_165, %c0_166] : memref<1x8x128xf32, #tpu.memory_space<vmem>>, vector<1x8x128xf32>
    %248 = vector.shape_cast %247 : vector<1x8x128xf32> to vector<8x128xf32>
    %249 = vector.shape_cast %246 : vector<8x128xf32> to vector<1x8x128xf32>
    tpu.vector_store %arg4[%c0_164, %c0_165, %c0_166], %249 {strides = array<i32>} : memref<1x8x128xf32, #tpu.memory_space<vmem>>, vector<1x8x128xf32>,
    return
  }
  func.func @transform_0(%arg0: i32) -> (i32, i32, i32) {
    %c0_i32 = arith.constant 0 : i32
    %c0_i32_0 = arith.constant 0 : i32
    %c0_i32_1 = arith.constant 0 : i32
    return %arg0, %c0_i32, %c0_i32_0 : i32, i32, i32
  }
  func.func @transform_1(%arg0: i32) -> (i32, i32, i32) {
    %c0_i32 = arith.constant 0 : i32
    %c0_i32_0 = arith.constant 0 : i32
    %c0_i32_1 = arith.constant 0 : i32
    %c0_i32_2 = arith.constant 0 : i32
    return %c0_i32, %c0_i32_0, %c0_i32_1 : i32, i32, i32
  }
  func.func @transform_2(%arg0: i32) -> (i32, i32, i32) {
    %c0_i32 = arith.constant 0 : i32
    %c0_i32_0 = arith.constant 0 : i32
    %c0_i32_1 = arith.constant 0 : i32
    %c0_i32_2 = arith.constant 0 : i32
    return %c0_i32, %c0_i32_0, %c0_i32_1 : i32, i32, i32
  }
  func.func @transform_3(%arg0: i32) -> (i32, i32, i32) {
    %c0_i32 = arith.constant 0 : i32
    %c0_i32_0 = arith.constant 0 : i32
    %c0_i32_1 = arith.constant 0 : i32
    return %arg0, %c0_i32, %c0_i32_0 : i32, i32, i32
  }
}

module attributes {stable_mosaic.version = 11 : i64} {
  func.func @res_stack_kernel(%arg0: i32, %arg1: memref<1x8x128xf32, #tpu.memory_space<vmem>>, %arg2: memref<8x8x24xf32, #tpu.memory_space<vmem>>, %arg3: memref<8x8x1xf32, #tpu.memory_space<vmem>>, %arg4: memref<1x8x128xf32, #tpu.memory_space<vmem>>, %arg5: memref<24x128xf32, #tpu.memory_space<vmem>>) attributes {dimension_semantics = [#tpu.dimension_semantics<parallel>], iteration_bounds = array<i64: 4>, scalar_prefetch = 0 : i64, scratch_operands = 1 : i64, tpu.core_type = #tpu.core_type<tc>, window_params = [{transform_indices = @transform_0, window_bounds = array<i64: 1, 8, 128>}, {pipeline_mode = #tpu.pipeline_mode<synchronous>, transform_indices = @transform_1, window_bounds = array<i64: 8, 8, 24>}, {pipeline_mode = #tpu.pipeline_mode<synchronous>, transform_indices = @transform_2, window_bounds = array<i64: 8, 8, 1>}, {transform_indices = @transform_3, window_bounds = array<i64: 1, 8, 128>}]} {
    %c0 = arith.constant 0 : index
    %c0_0 = arith.constant 0 : index
    %c0_1 = arith.constant 0 : index
    %0 = vector.load %arg1[%c0, %c0_0, %c0_1] : memref<1x8x128xf32, #tpu.memory_space<vmem>>, vector<1x8x128xf32>
    %1 = vector.shape_cast %0 : vector<1x8x128xf32> to vector<8x128xf32>
    %2 = tpu.iota {dimensions = array<i32: 1>} : vector<1x128xi32>
    %c128_i32 = arith.constant 128 : i32
    %c0_i32 = arith.constant 0 : i32
    %3 = arith.cmpi eq, %c128_i32, %c0_i32 : i32
    %c1_i32 = arith.constant 1 : i32
    %4 = arith.select %3, %c1_i32, %c128_i32 : i32
    %5 = vector.broadcast %4 : i32 to vector<1x128xi32>
    %6 = arith.remsi %2, %5 : vector<1x128xi32>
    %c0_i32_2 = arith.constant 0 : i32
    %7 = vector.broadcast %c0_i32_2 : i32 to vector<1x128xi32>
    %8 = arith.cmpi ne, %6, %7 : vector<1x128xi32>
    %c0_i32_3 = arith.constant 0 : i32
    %9 = vector.broadcast %c0_i32_3 : i32 to vector<1x128xi32>
    %10 = arith.cmpi slt, %6, %9 : vector<1x128xi32>
    %c0_i32_4 = arith.constant 0 : i32
    %11 = arith.cmpi slt, %4, %c0_i32_4 : i32
    %12 = vector.broadcast %11 : i1 to vector<1x128xi1>
    %13 = vector.broadcast %12 : vector<1x128xi1> to vector<1x128xi1>
    %14 = arith.xori %10, %13 : vector<1x128xi1>
    %15 = arith.andi %14, %8 : vector<1x128xi1>
    %16 = vector.broadcast %4 : i32 to vector<1x128xi32>
    %17 = arith.addi %6, %16 : vector<1x128xi32>
    %18 = arith.select %15, %17, %6 : vector<1x128xi1>, vector<1x128xi32>
    %cst = arith.constant 0.00999999977 : f32
    %19 = vector.broadcast %cst : f32 to vector<8x128xf32>
    %20 = arith.mulf %19, %1 : vector<8x128xf32>
    %21 = arith.maximumf %1, %20 : vector<8x128xf32>
    %c1_i32_5 = arith.constant 1 : i32
    %22 = vector.broadcast %c1_i32_5 : i32 to vector<1x128xi32>
    %23 = arith.cmpi sge, %18, %22 : vector<1x128xi32>
    %c127_i32 = arith.constant 127 : i32
    %24 = vector.broadcast %c127_i32 : i32 to vector<1x128xi32>
    %25 = arith.cmpi slt, %18, %24 : vector<1x128xi32>
    %c1_i32_6 = arith.constant 1 : i32
    %26 = tpu.dynamic_rotate %21 by %c1_i32_6 dim 1 : vector<8x128xf32>, i32 -> vector<8x128xf32>
    %cst_7 = arith.constant 0.000000e+00 : f32
    %27 = vector.shape_cast %23 : vector<1x128xi1> to vector<1x128xi1>
    %28 = vector.broadcast %27 : vector<1x128xi1> to vector<8x128xi1>
    %29 = vector.broadcast %cst_7 : f32 to vector<8x128xf32>
    %30 = arith.select %28, %26, %29 : vector<8x128xi1>, vector<8x128xf32>
    %c127_i32_8 = arith.constant 127 : i32
    %31 = tpu.dynamic_rotate %21 by %c127_i32_8 dim 1 : vector<8x128xf32>, i32 -> vector<8x128xf32>
    %cst_9 = arith.constant 0.000000e+00 : f32
    %32 = vector.shape_cast %25 : vector<1x128xi1> to vector<1x128xi1>
    %33 = vector.broadcast %32 : vector<1x128xi1> to vector<8x128xi1>
    %34 = vector.broadcast %cst_9 : f32 to vector<8x128xf32>
    %35 = arith.select %33, %31, %34 : vector<8x128xi1>, vector<8x128xf32>
    %c0_10 = arith.constant 0 : index
    %c0_11 = arith.constant 0 : index
    %36 = vector.load %arg5[%c0_10, %c0_11] : memref<24x128xf32, #tpu.memory_space<vmem>>, vector<8x128xf32>
    tpu.vector_store %arg5[%c0_10, %c0_11], %30 {strides = array<i32>} : memref<24x128xf32, #tpu.memory_space<vmem>>, vector<8x128xf32>,
    %c8 = arith.constant 8 : index
    %c0_12 = arith.constant 0 : index
    %37 = vector.load %arg5[%c8, %c0_12] : memref<24x128xf32, #tpu.memory_space<vmem>>, vector<8x128xf32>
    tpu.vector_store %arg5[%c8, %c0_12], %21 {strides = array<i32>} : memref<24x128xf32, #tpu.memory_space<vmem>>, vector<8x128xf32>,
    %c16 = arith.constant 16 : index
    %c0_13 = arith.constant 0 : index
    %38 = vector.load %arg5[%c16, %c0_13] : memref<24x128xf32, #tpu.memory_space<vmem>>, vector<8x128xf32>
    tpu.vector_store %arg5[%c16, %c0_13], %35 {strides = array<i32>} : memref<24x128xf32, #tpu.memory_space<vmem>>, vector<8x128xf32>,
    %c0_14 = arith.constant 0 : index
    %c0_15 = arith.constant 0 : index
    %39 = vector.load %arg5[%c0_14, %c0_15] : memref<24x128xf32, #tpu.memory_space<vmem>>, vector<24x128xf32>
    %c0_16 = arith.constant 0 : index
    %c0_17 = arith.constant 0 : index
    %c0_18 = arith.constant 0 : index
    %40 = vector.load %arg2[%c0_16, %c0_17, %c0_18] : memref<8x8x24xf32, #tpu.memory_space<vmem>>, vector<1x8x24xf32>
    %41 = vector.shape_cast %40 : vector<1x8x24xf32> to vector<8x24xf32>
    %cst_19 = arith.constant dense<0.000000e+00> : vector<8x128xf32>
    %42 = tpu.matmul %41, %39, %cst_19 {dimension_numbers = #tpu.dot_dimension_numbers<[1], [0], [0], [1], [0, 0, 1, 1], [], []>} : vector<8x24xf32>, vector<24x128xf32>, vector<8x128xf32> -> vector<8x128xf32>
    %c0_20 = arith.constant 0 : index
    %c0_21 = arith.constant 0 : index
    %c0_22 = arith.constant 0 : index
    %43 = vector.load %arg3[%c0_20, %c0_21, %c0_22] : memref<8x8x1xf32, #tpu.memory_space<vmem>>, vector<1x8x1xf32>
    %44 = vector.shape_cast %43 : vector<1x8x1xf32> to vector<8x1xf32>
    %45 = vector.broadcast %44 : vector<8x1xf32> to vector<8x128xf32>
    %46 = arith.addf %42, %45 : vector<8x128xf32>
    %cst_23 = arith.constant 0.00999999977 : f32
    %47 = vector.broadcast %cst_23 : f32 to vector<8x128xf32>
    %48 = arith.mulf %47, %46 : vector<8x128xf32>
    %49 = arith.maximumf %46, %48 : vector<8x128xf32>
    %c1_i32_24 = arith.constant 1 : i32
    %50 = vector.broadcast %c1_i32_24 : i32 to vector<1x128xi32>
    %51 = arith.cmpi sge, %18, %50 : vector<1x128xi32>
    %c127_i32_25 = arith.constant 127 : i32
    %52 = vector.broadcast %c127_i32_25 : i32 to vector<1x128xi32>
    %53 = arith.cmpi slt, %18, %52 : vector<1x128xi32>
    %c1_i32_26 = arith.constant 1 : i32
    %54 = tpu.dynamic_rotate %49 by %c1_i32_26 dim 1 : vector<8x128xf32>, i32 -> vector<8x128xf32>
    %cst_27 = arith.constant 0.000000e+00 : f32
    %55 = vector.shape_cast %51 : vector<1x128xi1> to vector<1x128xi1>
    %56 = vector.broadcast %55 : vector<1x128xi1> to vector<8x128xi1>
    %57 = vector.broadcast %cst_27 : f32 to vector<8x128xf32>
    %58 = arith.select %56, %54, %57 : vector<8x128xi1>, vector<8x128xf32>
    %c127_i32_28 = arith.constant 127 : i32
    %59 = tpu.dynamic_rotate %49 by %c127_i32_28 dim 1 : vector<8x128xf32>, i32 -> vector<8x128xf32>
    %cst_29 = arith.constant 0.000000e+00 : f32
    %60 = vector.shape_cast %53 : vector<1x128xi1> to vector<1x128xi1>
    %61 = vector.broadcast %60 : vector<1x128xi1> to vector<8x128xi1>
    %62 = vector.broadcast %cst_29 : f32 to vector<8x128xf32>
    %63 = arith.select %61, %59, %62 : vector<8x128xi1>, vector<8x128xf32>
    %c0_30 = arith.constant 0 : index
    %c0_31 = arith.constant 0 : index
    %64 = vector.load %arg5[%c0_30, %c0_31] : memref<24x128xf32, #tpu.memory_space<vmem>>, vector<8x128xf32>
    tpu.vector_store %arg5[%c0_30, %c0_31], %58 {strides = array<i32>} : memref<24x128xf32, #tpu.memory_space<vmem>>, vector<8x128xf32>,
    %c8_32 = arith.constant 8 : index
    %c0_33 = arith.constant 0 : index
    %65 = vector.load %arg5[%c8_32, %c0_33] : memref<24x128xf32, #tpu.memory_space<vmem>>, vector<8x128xf32>
    tpu.vector_store %arg5[%c8_32, %c0_33], %49 {strides = array<i32>} : memref<24x128xf32, #tpu.memory_space<vmem>>, vector<8x128xf32>,
    %c16_34 = arith.constant 16 : index
    %c0_35 = arith.constant 0 : index
    %66 = vector.load %arg5[%c16_34, %c0_35] : memref<24x128xf32, #tpu.memory_space<vmem>>, vector<8x128xf32>
    tpu.vector_store %arg5[%c16_34, %c0_35], %63 {strides = array<i32>} : memref<24x128xf32, #tpu.memory_space<vmem>>, vector<8x128xf32>,
    %c0_36 = arith.constant 0 : index
    %c0_37 = arith.constant 0 : index
    %67 = vector.load %arg5[%c0_36, %c0_37] : memref<24x128xf32, #tpu.memory_space<vmem>>, vector<24x128xf32>
    %c1 = arith.constant 1 : index
    %c0_38 = arith.constant 0 : index
    %c0_39 = arith.constant 0 : index
    %68 = vector.load %arg2[%c1, %c0_38, %c0_39] : memref<8x8x24xf32, #tpu.memory_space<vmem>>, vector<1x8x24xf32>
    %69 = vector.shape_cast %68 : vector<1x8x24xf32> to vector<8x24xf32>
    %cst_40 = arith.constant dense<0.000000e+00> : vector<8x128xf32>
    %70 = tpu.matmul %69, %67, %cst_40 {dimension_numbers = #tpu.dot_dimension_numbers<[1], [0], [0], [1], [0, 0, 1, 1], [], []>} : vector<8x24xf32>, vector<24x128xf32>, vector<8x128xf32> -> vector<8x128xf32>
    %c1_41 = arith.constant 1 : index
    %c0_42 = arith.constant 0 : index
    %c0_43 = arith.constant 0 : index
    %71 = vector.load %arg3[%c1_41, %c0_42, %c0_43] : memref<8x8x1xf32, #tpu.memory_space<vmem>>, vector<1x8x1xf32>
    %72 = vector.shape_cast %71 : vector<1x8x1xf32> to vector<8x1xf32>
    %73 = vector.broadcast %72 : vector<8x1xf32> to vector<8x128xf32>
    %74 = arith.addf %70, %73 : vector<8x128xf32>
    %75 = arith.addf %1, %74 : vector<8x128xf32>
    %cst_44 = arith.constant 0.00999999977 : f32
    %76 = vector.broadcast %cst_44 : f32 to vector<8x128xf32>
    %77 = arith.mulf %76, %75 : vector<8x128xf32>
    %78 = arith.maximumf %75, %77 : vector<8x128xf32>
    %c3_i32 = arith.constant 3 : i32
    %79 = vector.broadcast %c3_i32 : i32 to vector<1x128xi32>
    %80 = arith.cmpi sge, %18, %79 : vector<1x128xi32>
    %c125_i32 = arith.constant 125 : i32
    %81 = vector.broadcast %c125_i32 : i32 to vector<1x128xi32>
    %82 = arith.cmpi slt, %18, %81 : vector<1x128xi32>
    %c3_i32_45 = arith.constant 3 : i32
    %83 = tpu.dynamic_rotate %78 by %c3_i32_45 dim 1 : vector<8x128xf32>, i32 -> vector<8x128xf32>
    %cst_46 = arith.constant 0.000000e+00 : f32
    %84 = vector.shape_cast %80 : vector<1x128xi1> to vector<1x128xi1>
    %85 = vector.broadcast %84 : vector<1x128xi1> to vector<8x128xi1>
    %86 = vector.broadcast %cst_46 : f32 to vector<8x128xf32>
    %87 = arith.select %85, %83, %86 : vector<8x128xi1>, vector<8x128xf32>
    %c125_i32_47 = arith.constant 125 : i32
    %88 = tpu.dynamic_rotate %78 by %c125_i32_47 dim 1 : vector<8x128xf32>, i32 -> vector<8x128xf32>
    %cst_48 = arith.constant 0.000000e+00 : f32
    %89 = vector.shape_cast %82 : vector<1x128xi1> to vector<1x128xi1>
    %90 = vector.broadcast %89 : vector<1x128xi1> to vector<8x128xi1>
    %91 = vector.broadcast %cst_48 : f32 to vector<8x128xf32>
    %92 = arith.select %90, %88, %91 : vector<8x128xi1>, vector<8x128xf32>
    %c0_49 = arith.constant 0 : index
    %c0_50 = arith.constant 0 : index
    %93 = vector.load %arg5[%c0_49, %c0_50] : memref<24x128xf32, #tpu.memory_space<vmem>>, vector<8x128xf32>
    tpu.vector_store %arg5[%c0_49, %c0_50], %87 {strides = array<i32>} : memref<24x128xf32, #tpu.memory_space<vmem>>, vector<8x128xf32>,
    %c8_51 = arith.constant 8 : index
    %c0_52 = arith.constant 0 : index
    %94 = vector.load %arg5[%c8_51, %c0_52] : memref<24x128xf32, #tpu.memory_space<vmem>>, vector<8x128xf32>
    tpu.vector_store %arg5[%c8_51, %c0_52], %78 {strides = array<i32>} : memref<24x128xf32, #tpu.memory_space<vmem>>, vector<8x128xf32>,
    %c16_53 = arith.constant 16 : index
    %c0_54 = arith.constant 0 : index
    %95 = vector.load %arg5[%c16_53, %c0_54] : memref<24x128xf32, #tpu.memory_space<vmem>>, vector<8x128xf32>
    tpu.vector_store %arg5[%c16_53, %c0_54], %92 {strides = array<i32>} : memref<24x128xf32, #tpu.memory_space<vmem>>, vector<8x128xf32>,
    %c0_55 = arith.constant 0 : index
    %c0_56 = arith.constant 0 : index
    %96 = vector.load %arg5[%c0_55, %c0_56] : memref<24x128xf32, #tpu.memory_space<vmem>>, vector<24x128xf32>
    %c2 = arith.constant 2 : index
    %c0_57 = arith.constant 0 : index
    %c0_58 = arith.constant 0 : index
    %97 = vector.load %arg2[%c2, %c0_57, %c0_58] : memref<8x8x24xf32, #tpu.memory_space<vmem>>, vector<1x8x24xf32>
    %98 = vector.shape_cast %97 : vector<1x8x24xf32> to vector<8x24xf32>
    %cst_59 = arith.constant dense<0.000000e+00> : vector<8x128xf32>
    %99 = tpu.matmul %98, %96, %cst_59 {dimension_numbers = #tpu.dot_dimension_numbers<[1], [0], [0], [1], [0, 0, 1, 1], [], []>} : vector<8x24xf32>, vector<24x128xf32>, vector<8x128xf32> -> vector<8x128xf32>
    %c2_60 = arith.constant 2 : index
    %c0_61 = arith.constant 0 : index
    %c0_62 = arith.constant 0 : index
    %100 = vector.load %arg3[%c2_60, %c0_61, %c0_62] : memref<8x8x1xf32, #tpu.memory_space<vmem>>, vector<1x8x1xf32>
    %101 = vector.shape_cast %100 : vector<1x8x1xf32> to vector<8x1xf32>
    %102 = vector.broadcast %101 : vector<8x1xf32> to vector<8x128xf32>
    %103 = arith.addf %99, %102 : vector<8x128xf32>
    %cst_63 = arith.constant 0.00999999977 : f32
    %104 = vector.broadcast %cst_63 : f32 to vector<8x128xf32>
    %105 = arith.mulf %104, %103 : vector<8x128xf32>
    %106 = arith.maximumf %103, %105 : vector<8x128xf32>
    %c1_i32_64 = arith.constant 1 : i32
    %107 = vector.broadcast %c1_i32_64 : i32 to vector<1x128xi32>
    %108 = arith.cmpi sge, %18, %107 : vector<1x128xi32>
    %c127_i32_65 = arith.constant 127 : i32
    %109 = vector.broadcast %c127_i32_65 : i32 to vector<1x128xi32>
    %110 = arith.cmpi slt, %18, %109 : vector<1x128xi32>
    %c1_i32_66 = arith.constant 1 : i32
    %111 = tpu.dynamic_rotate %106 by %c1_i32_66 dim 1 : vector<8x128xf32>, i32 -> vector<8x128xf32>
    %cst_67 = arith.constant 0.000000e+00 : f32
    %112 = vector.shape_cast %108 : vector<1x128xi1> to vector<1x128xi1>
    %113 = vector.broadcast %112 : vector<1x128xi1> to vector<8x128xi1>
    %114 = vector.broadcast %cst_67 : f32 to vector<8x128xf32>
    %115 = arith.select %113, %111, %114 : vector<8x128xi1>, vector<8x128xf32>
    %c127_i32_68 = arith.constant 127 : i32
    %116 = tpu.dynamic_rotate %106 by %c127_i32_68 dim 1 : vector<8x128xf32>, i32 -> vector<8x128xf32>
    %cst_69 = arith.constant 0.000000e+00 : f32
    %117 = vector.shape_cast %110 : vector<1x128xi1> to vector<1x128xi1>
    %118 = vector.broadcast %117 : vector<1x128xi1> to vector<8x128xi1>
    %119 = vector.broadcast %cst_69 : f32 to vector<8x128xf32>
    %120 = arith.select %118, %116, %119 : vector<8x128xi1>, vector<8x128xf32>
    %c0_70 = arith.constant 0 : index
    %c0_71 = arith.constant 0 : index
    %121 = vector.load %arg5[%c0_70, %c0_71] : memref<24x128xf32, #tpu.memory_space<vmem>>, vector<8x128xf32>
    tpu.vector_store %arg5[%c0_70, %c0_71], %115 {strides = array<i32>} : memref<24x128xf32, #tpu.memory_space<vmem>>, vector<8x128xf32>,
    %c8_72 = arith.constant 8 : index
    %c0_73 = arith.constant 0 : index
    %122 = vector.load %arg5[%c8_72, %c0_73] : memref<24x128xf32, #tpu.memory_space<vmem>>, vector<8x128xf32>
    tpu.vector_store %arg5[%c8_72, %c0_73], %106 {strides = array<i32>} : memref<24x128xf32, #tpu.memory_space<vmem>>, vector<8x128xf32>,
    %c16_74 = arith.constant 16 : index
    %c0_75 = arith.constant 0 : index
    %123 = vector.load %arg5[%c16_74, %c0_75] : memref<24x128xf32, #tpu.memory_space<vmem>>, vector<8x128xf32>
    tpu.vector_store %arg5[%c16_74, %c0_75], %120 {strides = array<i32>} : memref<24x128xf32, #tpu.memory_space<vmem>>, vector<8x128xf32>,
    %c0_76 = arith.constant 0 : index
    %c0_77 = arith.constant 0 : index
    %124 = vector.load %arg5[%c0_76, %c0_77] : memref<24x128xf32, #tpu.memory_space<vmem>>, vector<24x128xf32>
    %c3 = arith.constant 3 : index
    %c0_78 = arith.constant 0 : index
    %c0_79 = arith.constant 0 : index
    %125 = vector.load %arg2[%c3, %c0_78, %c0_79] : memref<8x8x24xf32, #tpu.memory_space<vmem>>, vector<1x8x24xf32>
    %126 = vector.shape_cast %125 : vector<1x8x24xf32> to vector<8x24xf32>
    %cst_80 = arith.constant dense<0.000000e+00> : vector<8x128xf32>
    %127 = tpu.matmul %126, %124, %cst_80 {dimension_numbers = #tpu.dot_dimension_numbers<[1], [0], [0], [1], [0, 0, 1, 1], [], []>} : vector<8x24xf32>, vector<24x128xf32>, vector<8x128xf32> -> vector<8x128xf32>
    %c3_81 = arith.constant 3 : index
    %c0_82 = arith.constant 0 : index
    %c0_83 = arith.constant 0 : index
    %128 = vector.load %arg3[%c3_81, %c0_82, %c0_83] : memref<8x8x1xf32, #tpu.memory_space<vmem>>, vector<1x8x1xf32>
    %129 = vector.shape_cast %128 : vector<1x8x1xf32> to vector<8x1xf32>
    %130 = vector.broadcast %129 : vector<8x1xf32> to vector<8x128xf32>
    %131 = arith.addf %127, %130 : vector<8x128xf32>
    %132 = arith.addf %75, %131 : vector<8x128xf32>
    %cst_84 = arith.constant 0.00999999977 : f32
    %133 = vector.broadcast %cst_84 : f32 to vector<8x128xf32>
    %134 = arith.mulf %133, %132 : vector<8x128xf32>
    %135 = arith.maximumf %132, %134 : vector<8x128xf32>
    %c9_i32 = arith.constant 9 : i32
    %136 = vector.broadcast %c9_i32 : i32 to vector<1x128xi32>
    %137 = arith.cmpi sge, %18, %136 : vector<1x128xi32>
    %c119_i32 = arith.constant 119 : i32
    %138 = vector.broadcast %c119_i32 : i32 to vector<1x128xi32>
    %139 = arith.cmpi slt, %18, %138 : vector<1x128xi32>
    %c9_i32_85 = arith.constant 9 : i32
    %140 = tpu.dynamic_rotate %135 by %c9_i32_85 dim 1 : vector<8x128xf32>, i32 -> vector<8x128xf32>
    %cst_86 = arith.constant 0.000000e+00 : f32
    %141 = vector.shape_cast %137 : vector<1x128xi1> to vector<1x128xi1>
    %142 = vector.broadcast %141 : vector<1x128xi1> to vector<8x128xi1>
    %143 = vector.broadcast %cst_86 : f32 to vector<8x128xf32>
    %144 = arith.select %142, %140, %143 : vector<8x128xi1>, vector<8x128xf32>
    %c119_i32_87 = arith.constant 119 : i32
    %145 = tpu.dynamic_rotate %135 by %c119_i32_87 dim 1 : vector<8x128xf32>, i32 -> vector<8x128xf32>
    %cst_88 = arith.constant 0.000000e+00 : f32
    %146 = vector.shape_cast %139 : vector<1x128xi1> to vector<1x128xi1>
    %147 = vector.broadcast %146 : vector<1x128xi1> to vector<8x128xi1>
    %148 = vector.broadcast %cst_88 : f32 to vector<8x128xf32>
    %149 = arith.select %147, %145, %148 : vector<8x128xi1>, vector<8x128xf32>
    %c0_89 = arith.constant 0 : index
    %c0_90 = arith.constant 0 : index
    %150 = vector.load %arg5[%c0_89, %c0_90] : memref<24x128xf32, #tpu.memory_space<vmem>>, vector<8x128xf32>
    tpu.vector_store %arg5[%c0_89, %c0_90], %144 {strides = array<i32>} : memref<24x128xf32, #tpu.memory_space<vmem>>, vector<8x128xf32>,
    %c8_91 = arith.constant 8 : index
    %c0_92 = arith.constant 0 : index
    %151 = vector.load %arg5[%c8_91, %c0_92] : memref<24x128xf32, #tpu.memory_space<vmem>>, vector<8x128xf32>
    tpu.vector_store %arg5[%c8_91, %c0_92], %135 {strides = array<i32>} : memref<24x128xf32, #tpu.memory_space<vmem>>, vector<8x128xf32>,
    %c16_93 = arith.constant 16 : index
    %c0_94 = arith.constant 0 : index
    %152 = vector.load %arg5[%c16_93, %c0_94] : memref<24x128xf32, #tpu.memory_space<vmem>>, vector<8x128xf32>
    tpu.vector_store %arg5[%c16_93, %c0_94], %149 {strides = array<i32>} : memref<24x128xf32, #tpu.memory_space<vmem>>, vector<8x128xf32>,
    %c0_95 = arith.constant 0 : index
    %c0_96 = arith.constant 0 : index
    %153 = vector.load %arg5[%c0_95, %c0_96] : memref<24x128xf32, #tpu.memory_space<vmem>>, vector<24x128xf32>
    %c4 = arith.constant 4 : index
    %c0_97 = arith.constant 0 : index
    %c0_98 = arith.constant 0 : index
    %154 = vector.load %arg2[%c4, %c0_97, %c0_98] : memref<8x8x24xf32, #tpu.memory_space<vmem>>, vector<1x8x24xf32>
    %155 = vector.shape_cast %154 : vector<1x8x24xf32> to vector<8x24xf32>
    %cst_99 = arith.constant dense<0.000000e+00> : vector<8x128xf32>
    %156 = tpu.matmul %155, %153, %cst_99 {dimension_numbers = #tpu.dot_dimension_numbers<[1], [0], [0], [1], [0, 0, 1, 1], [], []>} : vector<8x24xf32>, vector<24x128xf32>, vector<8x128xf32> -> vector<8x128xf32>
    %c4_100 = arith.constant 4 : index
    %c0_101 = arith.constant 0 : index
    %c0_102 = arith.constant 0 : index
    %157 = vector.load %arg3[%c4_100, %c0_101, %c0_102] : memref<8x8x1xf32, #tpu.memory_space<vmem>>, vector<1x8x1xf32>
    %158 = vector.shape_cast %157 : vector<1x8x1xf32> to vector<8x1xf32>
    %159 = vector.broadcast %158 : vector<8x1xf32> to vector<8x128xf32>
    %160 = arith.addf %156, %159 : vector<8x128xf32>
    %cst_103 = arith.constant 0.00999999977 : f32
    %161 = vector.broadcast %cst_103 : f32 to vector<8x128xf32>
    %162 = arith.mulf %161, %160 : vector<8x128xf32>
    %163 = arith.maximumf %160, %162 : vector<8x128xf32>
    %c1_i32_104 = arith.constant 1 : i32
    %164 = vector.broadcast %c1_i32_104 : i32 to vector<1x128xi32>
    %165 = arith.cmpi sge, %18, %164 : vector<1x128xi32>
    %c127_i32_105 = arith.constant 127 : i32
    %166 = vector.broadcast %c127_i32_105 : i32 to vector<1x128xi32>
    %167 = arith.cmpi slt, %18, %166 : vector<1x128xi32>
    %c1_i32_106 = arith.constant 1 : i32
    %168 = tpu.dynamic_rotate %163 by %c1_i32_106 dim 1 : vector<8x128xf32>, i32 -> vector<8x128xf32>
    %cst_107 = arith.constant 0.000000e+00 : f32
    %169 = vector.shape_cast %165 : vector<1x128xi1> to vector<1x128xi1>
    %170 = vector.broadcast %169 : vector<1x128xi1> to vector<8x128xi1>
    %171 = vector.broadcast %cst_107 : f32 to vector<8x128xf32>
    %172 = arith.select %170, %168, %171 : vector<8x128xi1>, vector<8x128xf32>
    %c127_i32_108 = arith.constant 127 : i32
    %173 = tpu.dynamic_rotate %163 by %c127_i32_108 dim 1 : vector<8x128xf32>, i32 -> vector<8x128xf32>
    %cst_109 = arith.constant 0.000000e+00 : f32
    %174 = vector.shape_cast %167 : vector<1x128xi1> to vector<1x128xi1>
    %175 = vector.broadcast %174 : vector<1x128xi1> to vector<8x128xi1>
    %176 = vector.broadcast %cst_109 : f32 to vector<8x128xf32>
    %177 = arith.select %175, %173, %176 : vector<8x128xi1>, vector<8x128xf32>
    %c0_110 = arith.constant 0 : index
    %c0_111 = arith.constant 0 : index
    %178 = vector.load %arg5[%c0_110, %c0_111] : memref<24x128xf32, #tpu.memory_space<vmem>>, vector<8x128xf32>
    tpu.vector_store %arg5[%c0_110, %c0_111], %172 {strides = array<i32>} : memref<24x128xf32, #tpu.memory_space<vmem>>, vector<8x128xf32>,
    %c8_112 = arith.constant 8 : index
    %c0_113 = arith.constant 0 : index
    %179 = vector.load %arg5[%c8_112, %c0_113] : memref<24x128xf32, #tpu.memory_space<vmem>>, vector<8x128xf32>
    tpu.vector_store %arg5[%c8_112, %c0_113], %163 {strides = array<i32>} : memref<24x128xf32, #tpu.memory_space<vmem>>, vector<8x128xf32>,
    %c16_114 = arith.constant 16 : index
    %c0_115 = arith.constant 0 : index
    %180 = vector.load %arg5[%c16_114, %c0_115] : memref<24x128xf32, #tpu.memory_space<vmem>>, vector<8x128xf32>
    tpu.vector_store %arg5[%c16_114, %c0_115], %177 {strides = array<i32>} : memref<24x128xf32, #tpu.memory_space<vmem>>, vector<8x128xf32>,
    %c0_116 = arith.constant 0 : index
    %c0_117 = arith.constant 0 : index
    %181 = vector.load %arg5[%c0_116, %c0_117] : memref<24x128xf32, #tpu.memory_space<vmem>>, vector<24x128xf32>
    %c5 = arith.constant 5 : index
    %c0_118 = arith.constant 0 : index
    %c0_119 = arith.constant 0 : index
    %182 = vector.load %arg2[%c5, %c0_118, %c0_119] : memref<8x8x24xf32, #tpu.memory_space<vmem>>, vector<1x8x24xf32>
    %183 = vector.shape_cast %182 : vector<1x8x24xf32> to vector<8x24xf32>
    %cst_120 = arith.constant dense<0.000000e+00> : vector<8x128xf32>
    %184 = tpu.matmul %183, %181, %cst_120 {dimension_numbers = #tpu.dot_dimension_numbers<[1], [0], [0], [1], [0, 0, 1, 1], [], []>} : vector<8x24xf32>, vector<24x128xf32>, vector<8x128xf32> -> vector<8x128xf32>
    %c5_121 = arith.constant 5 : index
    %c0_122 = arith.constant 0 : index
    %c0_123 = arith.constant 0 : index
    %185 = vector.load %arg3[%c5_121, %c0_122, %c0_123] : memref<8x8x1xf32, #tpu.memory_space<vmem>>, vector<1x8x1xf32>
    %186 = vector.shape_cast %185 : vector<1x8x1xf32> to vector<8x1xf32>
    %187 = vector.broadcast %186 : vector<8x1xf32> to vector<8x128xf32>
    %188 = arith.addf %184, %187 : vector<8x128xf32>
    %189 = arith.addf %132, %188 : vector<8x128xf32>
    %cst_124 = arith.constant 0.00999999977 : f32
    %190 = vector.broadcast %cst_124 : f32 to vector<8x128xf32>
    %191 = arith.mulf %190, %189 : vector<8x128xf32>
    %192 = arith.maximumf %189, %191 : vector<8x128xf32>
    %c27_i32 = arith.constant 27 : i32
    %193 = vector.broadcast %c27_i32 : i32 to vector<1x128xi32>
    %194 = arith.cmpi sge, %18, %193 : vector<1x128xi32>
    %c101_i32 = arith.constant 101 : i32
    %195 = vector.broadcast %c101_i32 : i32 to vector<1x128xi32>
    %196 = arith.cmpi slt, %18, %195 : vector<1x128xi32>
    %c27_i32_125 = arith.constant 27 : i32
    %197 = tpu.dynamic_rotate %192 by %c27_i32_125 dim 1 : vector<8x128xf32>, i32 -> vector<8x128xf32>
    %cst_126 = arith.constant 0.000000e+00 : f32
    %198 = vector.shape_cast %194 : vector<1x128xi1> to vector<1x128xi1>
    %199 = vector.broadcast %198 : vector<1x128xi1> to vector<8x128xi1>
    %200 = vector.broadcast %cst_126 : f32 to vector<8x128xf32>
    %201 = arith.select %199, %197, %200 : vector<8x128xi1>, vector<8x128xf32>
    %c101_i32_127 = arith.constant 101 : i32
    %202 = tpu.dynamic_rotate %192 by %c101_i32_127 dim 1 : vector<8x128xf32>, i32 -> vector<8x128xf32>
    %cst_128 = arith.constant 0.000000e+00 : f32
    %203 = vector.shape_cast %196 : vector<1x128xi1> to vector<1x128xi1>
    %204 = vector.broadcast %203 : vector<1x128xi1> to vector<8x128xi1>
    %205 = vector.broadcast %cst_128 : f32 to vector<8x128xf32>
    %206 = arith.select %204, %202, %205 : vector<8x128xi1>, vector<8x128xf32>
    %c0_129 = arith.constant 0 : index
    %c0_130 = arith.constant 0 : index
    %207 = vector.load %arg5[%c0_129, %c0_130] : memref<24x128xf32, #tpu.memory_space<vmem>>, vector<8x128xf32>
    tpu.vector_store %arg5[%c0_129, %c0_130], %201 {strides = array<i32>} : memref<24x128xf32, #tpu.memory_space<vmem>>, vector<8x128xf32>,
    %c8_131 = arith.constant 8 : index
    %c0_132 = arith.constant 0 : index
    %208 = vector.load %arg5[%c8_131, %c0_132] : memref<24x128xf32, #tpu.memory_space<vmem>>, vector<8x128xf32>
    tpu.vector_store %arg5[%c8_131, %c0_132], %192 {strides = array<i32>} : memref<24x128xf32, #tpu.memory_space<vmem>>, vector<8x128xf32>,
    %c16_133 = arith.constant 16 : index
    %c0_134 = arith.constant 0 : index
    %209 = vector.load %arg5[%c16_133, %c0_134] : memref<24x128xf32, #tpu.memory_space<vmem>>, vector<8x128xf32>
    tpu.vector_store %arg5[%c16_133, %c0_134], %206 {strides = array<i32>} : memref<24x128xf32, #tpu.memory_space<vmem>>, vector<8x128xf32>,
    %c0_135 = arith.constant 0 : index
    %c0_136 = arith.constant 0 : index
    %210 = vector.load %arg5[%c0_135, %c0_136] : memref<24x128xf32, #tpu.memory_space<vmem>>, vector<24x128xf32>
    %c6 = arith.constant 6 : index
    %c0_137 = arith.constant 0 : index
    %c0_138 = arith.constant 0 : index
    %211 = vector.load %arg2[%c6, %c0_137, %c0_138] : memref<8x8x24xf32, #tpu.memory_space<vmem>>, vector<1x8x24xf32>
    %212 = vector.shape_cast %211 : vector<1x8x24xf32> to vector<8x24xf32>
    %cst_139 = arith.constant dense<0.000000e+00> : vector<8x128xf32>
    %213 = tpu.matmul %212, %210, %cst_139 {dimension_numbers = #tpu.dot_dimension_numbers<[1], [0], [0], [1], [0, 0, 1, 1], [], []>} : vector<8x24xf32>, vector<24x128xf32>, vector<8x128xf32> -> vector<8x128xf32>
    %c6_140 = arith.constant 6 : index
    %c0_141 = arith.constant 0 : index
    %c0_142 = arith.constant 0 : index
    %214 = vector.load %arg3[%c6_140, %c0_141, %c0_142] : memref<8x8x1xf32, #tpu.memory_space<vmem>>, vector<1x8x1xf32>
    %215 = vector.shape_cast %214 : vector<1x8x1xf32> to vector<8x1xf32>
    %216 = vector.broadcast %215 : vector<8x1xf32> to vector<8x128xf32>
    %217 = arith.addf %213, %216 : vector<8x128xf32>
    %cst_143 = arith.constant 0.00999999977 : f32
    %218 = vector.broadcast %cst_143 : f32 to vector<8x128xf32>
    %219 = arith.mulf %218, %217 : vector<8x128xf32>
    %220 = arith.maximumf %217, %219 : vector<8x128xf32>
    %c1_i32_144 = arith.constant 1 : i32
    %221 = vector.broadcast %c1_i32_144 : i32 to vector<1x128xi32>
    %222 = arith.cmpi sge, %18, %221 : vector<1x128xi32>
    %c127_i32_145 = arith.constant 127 : i32
    %223 = vector.broadcast %c127_i32_145 : i32 to vector<1x128xi32>
    %224 = arith.cmpi slt, %18, %223 : vector<1x128xi32>
    %c1_i32_146 = arith.constant 1 : i32
    %225 = tpu.dynamic_rotate %220 by %c1_i32_146 dim 1 : vector<8x128xf32>, i32 -> vector<8x128xf32>
    %cst_147 = arith.constant 0.000000e+00 : f32
    %226 = vector.shape_cast %222 : vector<1x128xi1> to vector<1x128xi1>
    %227 = vector.broadcast %226 : vector<1x128xi1> to vector<8x128xi1>
    %228 = vector.broadcast %cst_147 : f32 to vector<8x128xf32>
    %229 = arith.select %227, %225, %228 : vector<8x128xi1>, vector<8x128xf32>
    %c127_i32_148 = arith.constant 127 : i32
    %230 = tpu.dynamic_rotate %220 by %c127_i32_148 dim 1 : vector<8x128xf32>, i32 -> vector<8x128xf32>
    %cst_149 = arith.constant 0.000000e+00 : f32
    %231 = vector.shape_cast %224 : vector<1x128xi1> to vector<1x128xi1>
    %232 = vector.broadcast %231 : vector<1x128xi1> to vector<8x128xi1>
    %233 = vector.broadcast %cst_149 : f32 to vector<8x128xf32>
    %234 = arith.select %232, %230, %233 : vector<8x128xi1>, vector<8x128xf32>
    %c0_150 = arith.constant 0 : index
    %c0_151 = arith.constant 0 : index
    %235 = vector.load %arg5[%c0_150, %c0_151] : memref<24x128xf32, #tpu.memory_space<vmem>>, vector<8x128xf32>
    tpu.vector_store %arg5[%c0_150, %c0_151], %229 {strides = array<i32>} : memref<24x128xf32, #tpu.memory_space<vmem>>, vector<8x128xf32>,
    %c8_152 = arith.constant 8 : index
    %c0_153 = arith.constant 0 : index
    %236 = vector.load %arg5[%c8_152, %c0_153] : memref<24x128xf32, #tpu.memory_space<vmem>>, vector<8x128xf32>
    tpu.vector_store %arg5[%c8_152, %c0_153], %220 {strides = array<i32>} : memref<24x128xf32, #tpu.memory_space<vmem>>, vector<8x128xf32>,
    %c16_154 = arith.constant 16 : index
    %c0_155 = arith.constant 0 : index
    %237 = vector.load %arg5[%c16_154, %c0_155] : memref<24x128xf32, #tpu.memory_space<vmem>>, vector<8x128xf32>
    tpu.vector_store %arg5[%c16_154, %c0_155], %234 {strides = array<i32>} : memref<24x128xf32, #tpu.memory_space<vmem>>, vector<8x128xf32>,
    %c0_156 = arith.constant 0 : index
    %c0_157 = arith.constant 0 : index
    %238 = vector.load %arg5[%c0_156, %c0_157] : memref<24x128xf32, #tpu.memory_space<vmem>>, vector<24x128xf32>
    %c7 = arith.constant 7 : index
    %c0_158 = arith.constant 0 : index
    %c0_159 = arith.constant 0 : index
    %239 = vector.load %arg2[%c7, %c0_158, %c0_159] : memref<8x8x24xf32, #tpu.memory_space<vmem>>, vector<1x8x24xf32>
    %240 = vector.shape_cast %239 : vector<1x8x24xf32> to vector<8x24xf32>
    %cst_160 = arith.constant dense<0.000000e+00> : vector<8x128xf32>
    %241 = tpu.matmul %240, %238, %cst_160 {dimension_numbers = #tpu.dot_dimension_numbers<[1], [0], [0], [1], [0, 0, 1, 1], [], []>} : vector<8x24xf32>, vector<24x128xf32>, vector<8x128xf32> -> vector<8x128xf32>
    %c7_161 = arith.constant 7 : index
    %c0_162 = arith.constant 0 : index
    %c0_163 = arith.constant 0 : index
    %242 = vector.load %arg3[%c7_161, %c0_162, %c0_163] : memref<8x8x1xf32, #tpu.memory_space<vmem>>, vector<1x8x1xf32>
    %243 = vector.shape_cast %242 : vector<1x8x1xf32> to vector<8x1xf32>
    %244 = vector.broadcast %243 : vector<8x1xf32> to vector<8x128xf32>
    %245 = arith.addf %241, %244 : vector<8x128xf32>
    %246 = arith.addf %189, %245 : vector<8x128xf32>
    %c0_164 = arith.constant 0 : index
    %c0_165 = arith.constant 0 : index
    %c0_166 = arith.constant 0 : index
    %247 = vector.load %arg4[%c0_164, %c0_165, %c0_166] : memref<1x8x128xf32, #tpu.memory_space<vmem>>, vector<1x8x128xf32>
    %248 = vector.shape_cast %247 : vector<1x8x128xf32> to vector<8x128xf32>
    %249 = vector.shape_cast %246 : vector<8x128xf32> to vector<1x8x128xf32>
    tpu.vector_store %arg4[%c0_164, %c0_165, %c0_166], %249 {strides = array<i32>} : memref<1x8x128xf32, #tpu.memory_space<vmem>>, vector<1x8x128xf32>,
    return
  }
  func.func @transform_0(%arg0: i32) -> (i32, i32, i32) {
    %c0_i32 = arith.constant 0 : i32
    %c0_i32_0 = arith.constant 0 : i32
    %c0_i32_1 = arith.constant 0 : i32
    return %arg0, %c0_i32, %c0_i32_0 : i32, i32, i32
  }
  func.func @transform_1(%arg0: i32) -> (i32, i32, i32) {
    %c0_i32 = arith.constant 0 : i32
    %c0_i32_0 = arith.constant 0 : i32
    %c0_i32_1 = arith.constant 0 : i32
    %c0_i32_2 = arith.constant 0 : i32
    return %c0_i32, %c0_i32_0, %c0_i32_1 : i32, i32, i32
  }
  func.func @transform_2(%arg0: i32) -> (i32, i32, i32) {
    %c0_i32 = arith.constant 0 : i32
    %c0_i32_0 = arith.constant 0 : i32
    %c0_i32_1 = arith.constant 0 : i32
    %c0_i32_2 = arith.constant 0 : i32
    return %c0_i32, %c0_i32_0, %c0_i32_1 : i32, i32, i32
  }
  func.func @transform_3(%arg0: i32) -> (i32, i32, i32) {
    %c0_i32 = arith.constant 0 : i32
    %c0_i32_0 = arith.constant 0 : i32
    %c0_i32_1 = arith.constant 0 : i32
    return %arg0, %c0_i32, %c0_i32_0 : i32, i32, i32
  }
}

</mosaic_0001>

<llo_original>
// kernel: tpu_custom_call.1
$region0: #{tpu_custom_call.1}
  #allocation0 [shape = 'u32[]', space=smem, size = 0x4, offset = 0x4, fixed_abs, tag = 'smem constant byte address 0x4 - core index']
  #allocation1 [shape = 'u32[72,128]{1,0:T(1,128)}', space=vmem, size = 0x9000, scoped, tag = 'internal scratch']
  #allocation2 [shape = 'f32[24,128]{1,0:T(8,128)}', space=vmem, size = 0x3000, scoped, tag = 'scratch operand']
  %s0 = inlined_call_operand.hbm [shape: f32[4,8,128], index: 0, kind: input, shape index: {}]
  %s1 = inlined_call_operand.vmem [shape: f32[8,8,24], index: 1, kind: input, shape index: {}]
  %s2 = inlined_call_operand.vmem [shape: f32[8,8,1], index: 2, kind: input, shape index: {}]
  %s3 = inlined_call_operand.hbm [shape: f32[4,8,128], index: 3, kind: output, shape index: {}]
  %s4 = sld [smem:[#allocation0]]
  $region49: #{tpu_custom_call.1} parent=0
    _
  %s6 = ssub.s32 1, %s4
  %s7 = scalar_select 0, %s6, %s4
  $region1: #{tpu_custom_call.1} parent=0
    #allocation3 [shape = 'u8[8192]{0}', space=vmem, size = 0x2000, scoped, tag = 'input window, operand 0']
    #allocation4 [shape = 's32[2]{0}', space=sflag, size = 0x8, scoped, tag = 'scoped memory for tpu_custom_call.1']
    #allocation5 [shape = 's32[2]{0}', space=sflag, size = 0x8, scoped, tag = 'scoped memory for tpu_custom_call.1']
    #allocation6 [shape = 'u8[8192]{0}', space=vmem, size = 0x2000, scoped, tag = 'output window, operand 0']
    %8 = vsyncpa [#allocation4], 0
    %s9 = scalar_lea.sflag [#allocation4], 1
    %10 = vsyncpa %s9, 0
    %11 = vsyncpa [#allocation5], 0
    %s12 = scalar_lea.sflag [#allocation5], 1
    %13 = vsyncpa %s12, 0
    loop: start=0, step=1, limit=6
    $region2: #{tpu_custom_call.1} parent=1 // loop_pre_header
      _
    $region3: #{tpu_custom_call.1} parent=1 // loop_header
      %s15 = sphi 0, %s19
      %p16 = scmp.ge.s32.totalorder %s15, 6
      %s25 = sphi 0, %s27
      %s28 = sphi 0, %s25
      %s29 = sphi 0, %s28
      %s45 = sphi 0, %s29
      %s49 = sphi 0, %s49
      %s51 = sphi 0, %s49
      %s52 = sphi 0, %s51
      %s66 = sphi 0, %s52
      %s70 = sphi 0, %s70
      %s72 = sphi 0, %s70
      %s73 = sphi 0, %s72
      %s87 = sphi 0, %s73
      %s93 = sphi 0, %s95
      %s96 = sphi 0, %s93
      %s97 = sphi 0, %s96
      %s113 = sphi 0, %s97
    $region4: #{tpu_custom_call.1} parent=1 // loop_header_branch
      %18 = sbr.rel (%p16) target = $region8
    $region5: #{tpu_custom_call.1} parent=1 // loop_body
      %s20 = ssub.s32 %s15, 1
      %s21 = ssub.s32 %s15, 2
      %s22 = sadd.s32 %s15, 1
      %s23 = ssub.s32 %s15, %s22
      %p24 = scmp.eq.s32.totalorder %s23, 0
      %s26 = sadd.s32 %s25, 1
      %s27 = scalar_select %p24, %s25, %s26
      %p30 = pneg %p24
      %p31 = scmp.eq.s32.totalorder %s15, 3
      %p32 = por %p30, %p31
      %p33 = scmp.ne.s32.totalorder %s25, %s28
      %p34 = scmp.eq.s32.totalorder %s15, 0
      %p35 = por %p33, %p34
      %p36 = scmp.ne.s32.totalorder %s25, %s28
      %p37 = scmp.eq.s32.totalorder %s20, 3
      %p38 = por %p36, %p37
      %p39 = scmp.ne.s32.totalorder %s28, %s29
      %p40 = scmp.eq.s32.totalorder %s20, 0
      %p41 = por %p39, %p40
      %p42 = scmp.ne.s32.totalorder %s28, %s29
      %p43 = scmp.eq.s32.totalorder %s21, 3
      %p44 = por %p42, %p43
      %p46 = scmp.ne.s32.totalorder %s29, %s45
      %p47 = scmp.eq.s32.totalorder %s21, 0
      %p48 = por %p46, %p47
      %s50 = sadd.s32 %s49, 1
      %p53 = scmp.eq.s32.totalorder %s15, 3
      %p54 = scmp.ne.s32.totalorder %s49, %s51
      %p55 = scmp.eq.s32.totalorder %s15, 0
      %p56 = por %p54, %p55
      %p57 = scmp.ne.s32.totalorder %s49, %s51
      %p58 = scmp.eq.s32.totalorder %s20, 3
      %p59 = por %p57, %p58
      %p60 = scmp.ne.s32.totalorder %s51, %s52
      %p61 = scmp.eq.s32.totalorder %s20, 0
      %p62 = por %p60, %p61
      %p63 = scmp.ne.s32.totalorder %s51, %s52
      %p64 = scmp.eq.s32.totalorder %s21, 3
      %p65 = por %p63, %p64
      %p67 = scmp.ne.s32.totalorder %s52, %s66
      %p68 = scmp.eq.s32.totalorder %s21, 0
      %p69 = por %p67, %p68
      %s71 = sadd.s32 %s70, 1
      %p74 = scmp.eq.s32.totalorder %s15, 3
      %p75 = scmp.ne.s32.totalorder %s70, %s72
      %p76 = scmp.eq.s32.totalorder %s15, 0
      %p77 = por %p75, %p76
      %p78 = scmp.ne.s32.totalorder %s70, %s72
      %p79 = scmp.eq.s32.totalorder %s20, 3
      %p80 = por %p78, %p79
      %p81 = scmp.ne.s32.totalorder %s72, %s73
      %p82 = scmp.eq.s32.totalorder %s20, 0
      %p83 = por %p81, %p82
      %p84 = scmp.ne.s32.totalorder %s72, %s73
      %p85 = scmp.eq.s32.totalorder %s21, 3
      %p86 = por %p84, %p85
      %p88 = scmp.ne.s32.totalorder %s73, %s87
      %p89 = scmp.eq.s32.totalorder %s21, 0
      %p90 = por %p88, %p89
      %s91 = ssub.s32 %s15, %s22
      %p92 = scmp.eq.s32.totalorder %s91, 0
      %s94 = sadd.s32 %s93, 1
      %s95 = scalar_select %p92, %s93, %s94
      %p98 = pneg %p92
      %p99 = scmp.eq.s32.totalorder %s15, 3
      %p100 = por %p98, %p99
      %p101 = scmp.ne.s32.totalorder %s93, %s96
      %p102 = scmp.eq.s32.totalorder %s15, 0
      %p103 = por %p101, %p102
      %p104 = scmp.ne.s32.totalorder %s93, %s96
      %p105 = scmp.eq.s32.totalorder %s20, 3
      %p106 = por %p104, %p105
      %p107 = scmp.ne.s32.totalorder %s96, %s97
      %p108 = scmp.eq.s32.totalorder %s20, 0
      %p109 = por %p107, %p108
      %p110 = scmp.ne.s32.totalorder %s96, %s97
      %p111 = scmp.eq.s32.totalorder %s21, 3
      %p112 = por %p110, %p111
      %p114 = scmp.ne.s32.totalorder %s97, %s113
      %p115 = scmp.eq.s32.totalorder %s21, 0
      %p116 = por %p114, %p115
      %p117 = scmp.le.s32.totalorder 1, %s15
      %p118 = scmp.lt.s32.totalorder %s15, 5
      %p119 = pnand %p117, %p118
      %p120 = pneg %p119
      // Predicated region
      $region9: #{tpu_custom_call.1} parent=5 // pred_check
        _
      $region10: #{tpu_custom_call.1} parent=5 // pred_check_branch
        %122 = sbr.rel (%p119) target = $region12
      $region11: #{tpu_custom_call.1} parent=5 // pred_region
        %s123 = ssub.s32 %s15, 1
        // Predicated region
        $region13: #{tpu_custom_call.1} parent=11 // pred_check
          %p124 = pneg %p62
        $region14: #{tpu_custom_call.1} parent=11 // pred_check_branch
          %126 = sbr.rel (%p124) target = $region16
        $region15: #{tpu_custom_call.1} parent=11 // pred_region
          _
        $region16: #{tpu_custom_call.1} parent=11 // pred_fallthru
          _
        // Predicated region
        $region17: #{tpu_custom_call.1} parent=11 // pred_check
          %p127 = pneg %p83
        $region18: #{tpu_custom_call.1} parent=11 // pred_check_branch
          %129 = sbr.rel (%p127) target = $region20
        $region19: #{tpu_custom_call.1} parent=11 // pred_region
          _
        $region20: #{tpu_custom_call.1} parent=11 // pred_fallthru
          _
      $region12: #{tpu_custom_call.1} parent=5 // pred_fallthru
        _
      %p130 = scmp.lt.s32.totalorder %s15, 4
      // Predicated region
      $region21: #{tpu_custom_call.1} parent=5 // pred_check
        %p131 = pneg %p130
      $region22: #{tpu_custom_call.1} parent=5 // pred_check_branch
        %133 = sbr.rel (%p131) target = $region24
      $region23: #{tpu_custom_call.1} parent=5 // pred_region
        // Predicated region
        $region25: #{tpu_custom_call.1} parent=23 // pred_check
          %p134 = pneg %p35
        $region26: #{tpu_custom_call.1} parent=23 // pred_check_branch
          %136 = sbr.rel (%p134) target = $region28
        $region27: #{tpu_custom_call.1} parent=23 // pred_region
          %s137 = sand.u32 %s25, 1
          %s138 = scalar_lea.sflag [#allocation4], %s137
          %s139 = sand.u32 %s25, 1
          %s140 = smul.addr %s139, 8
          %s141 = scalar_lea.vmem [#allocation3], %s140
          %143 = vsyncadd %s138, 0
          %s144 = smul.addr %s15, 8
          %s145 = scalar_lea.hbm %s0, %s144
          %s147 = sshll.u32 %s145, 4
          %s148 = int_to_ptr.hbm [resolvable:$true] %s147
          %s149 = sshll.u32 %s141, 4
          %s150 = int_to_ptr.vmem [resolvable:$true] %s149
          %152 = dma.hbm_to_vmem [thread:$0]  %s148, 128, %s150, %s138
        $region28: #{tpu_custom_call.1} parent=23 // pred_fallthru
          _
      $region24: #{tpu_custom_call.1} parent=5 // pred_fallthru
        _
      %p153 = scmp.le.s32.totalorder 1, %s15
      %p154 = scmp.lt.s32.totalorder %s15, 5
      %p155 = pnand %p153, %p154
      %p156 = pneg %p155
      // Predicated region
      $region29: #{tpu_custom_call.1} parent=5 // pred_check
        _
      $region30: #{tpu_custom_call.1} parent=5 // pred_check_branch
        %158 = sbr.rel (%p155) target = $region32
      $region31: #{tpu_custom_call.1} parent=5 // pred_region
        %s159 = ssub.s32 %s15, 1
        %s160 = sand.u32 %s28, 1
        %s161 = scalar_lea.sflag [#allocation4], %s160
        %s162 = sand.u32 %s28, 1
        %s163 = smul.addr %s162, 8
        %s164 = scalar_lea.vmem [#allocation3], %s163
        // Predicated region
        $region33: #{tpu_custom_call.1} parent=31 // pred_check
          %p165 = pneg %p41
        $region34: #{tpu_custom_call.1} parent=31 // pred_check_branch
          %167 = sbr.rel (%p165) target = $region36
        $region35: #{tpu_custom_call.1} parent=31 // pred_region
          %169 = dma.done %s161, 128
        $region36: #{tpu_custom_call.1} parent=31 // pred_fallthru
          _
        %s170 = sand.u32 %s28, 1
        %s171 = scalar_lea.sflag [#allocation4], %s170
        %s172 = sand.u32 %s28, 1
        %s173 = smul.addr %s172, 8
        %s174 = scalar_lea.vmem [#allocation3], %s173
        %p175 = pneg %p41
        %p176 = pneg %p38
        %p177 = pneg %p62
        %p178 = pneg %p59
        %p179 = pneg %p83
        %p180 = pneg %p80
        %p181 = pneg %p109
        %p182 = pneg %p106
        %s183 = sand.u32 %s96, 1
        %s184 = scalar_lea.sflag [#allocation5], %s183
        %s185 = sand.u32 %s96, 1
        %s186 = smul.addr %s185, 8
        %s187 = scalar_lea.vmem [#allocation6], %s186
        %v188 = vld [vmem:[%s164] sm:$0xff]
        %v189 = vlaneseq
        %v190 = vand.u32 %v189, 127
        %vm191 = vcmp.lt.s32.totalorder %v190, 0
        %v192 = vsub.s32 0, %v190
        %v193 = vsel %vm191, %v192, %v190
        %v194 = vshrl.u32 %v193, 7
        %v195 = vand.u32 %v193, 127
        %v196 = vsub.s32 0, %v195
        %v197 = vsel %vm191, %v196, %v195
        %vm198 = vcmp.ne.s32.totalorder %v197, 0
        %vm199 = vcmp.lt.s32.totalorder %v197, 0
        %vm200 = vmand %vm199, %vm198
        %v201 = vadd.s32 %v197, 128
        %v202 = vsel %vm200, %v201, %v197
        %v203 = vmul.f32 %v188, 0.01
        %v204 = vmax.f32 %v188, %v203
        %vm205 = vcmp.ge.s32.totalorder %v202, 1
        %vm206 = vcmp.lt.s32.totalorder %v202, 127
        %207 = vrot.lane.b32.xlu0 %v204, 1
        %v208 = vpop.permute.xlu0 %207
        %v209 = vsel %vm205, 1, 0
        %vm210 = vcmp.eq.s32.totalorder %v209, 1
        %v211 = vsel %vm210, %v208, 0.0
        %212 = vrot.lane.b32.xlu0 %v204, 127
        %v213 = vpop.permute.xlu0 %212
        %v214 = vsel %vm206, 1, 0
        %vm215 = vcmp.eq.s32.totalorder %v214, 1
        %v216 = vsel %vm215, %v213, 0.0
        %217 = vst [vmem:[#allocation2] sm:$0xff] %v211
        %218 = vst [vmem:[#allocation2 + $0x8] sm:$0xff] %v204
        %219 = vst [vmem:[#allocation2 + $0x10] sm:$0xff] %v216
        %v220 = vld [vmem:[#allocation2] sm:$0xff]
        %v221 = vld [vmem:[#allocation2 + $0x8] sm:$0xff]
        %v222 = vld [vmem:[#allocation2 + $0x10] sm:$0xff]
        %v223 = vld [vmem:[%s1] sm:$0xff]
        %v224 = vld [vmem:[%s2] sm:$0xff]
        %226 = vset.pattern.permute.xlu0 0
        %227 = vperm.xlu0 %226, %v224
        %v228 = vpop.permute.xlu0 %227
        %vm230 = vcmask 195584
        %v232 = vsel %vm230, %v223, 0
        %234 = vmatpush.msra.mxu0 0.0
        %235 = vmatpush.msra.mxu0 0.0
        %236 = vmatpush.msra.mxu0 0.0
        %237 = vmatpush.msra.mxu0 0.0
        %238 = vmatpush.msra.mxu0 0.0
        %239 = vmatpush.msra.mxu0 0.0
        %240 = vmatpush.msra.mxu0 0.0
        %241 = vmatpush.msra.mxu0 0.0
        %242 = vmatpush.msra.mxu0 0.0
        %243 = vmatpush.msra.mxu0 0.0
        %244 = vmatpush.msra.mxu0 0.0
        %245 = vmatpush.msra.mxu0 0.0
        %246 = vmatpush.msra.mxu0 0.0
        %247 = vmatpush.msra.mxu0 %v222
        %248 = vmatpush.msra.mxu0 %v221
        %249 = vmatpush.msra.mxu0 %v220
        %250 = vmatmul.f32.gmra.mxu0 %v232
        %v251 = vpop.f32.mrf.mxu0
        %v252 = vadd.f32 %v228, %v251
        %253 = vdwg.mxu0
        %v254 = vmul.f32 %v252, 0.01
        %v255 = vmax.f32 %v252, %v254
        %256 = vrot.lane.b32.xlu0 %v255, 1
        %v257 = vpop.permute.xlu0 %256
        %v258 = vsel %vm210, %v257, 0.0
        %259 = vrot.lane.b32.xlu0 %v255, 127
        %v260 = vpop.permute.xlu0 %259
        %v261 = vsel %vm215, %v260, 0.0
        %262 = vst [vmem:[#allocation2] sm:$0xff] %v258
        %263 = vst [vmem:[#allocation2 + $0x8] sm:$0xff] %v255
        %264 = vst [vmem:[#allocation2 + $0x10] sm:$0xff] %v261
        %v265 = vld [vmem:[#allocation2] sm:$0xff]
        %v266 = vld [vmem:[#allocation2 + $0x8] sm:$0xff]
        %v267 = vld [vmem:[#allocation2 + $0x10] sm:$0xff]
        %s268 = scalar_lea.vmem %s1, 8
        %v269 = vld [vmem:[%s268] sm:$0xff]
        %s270 = scalar_lea.vmem %s2, 8
        %v271 = vld [vmem:[%s270] sm:$0xff]
        %273 = vset.pattern.permute.xlu0 0
        %274 = vperm.xlu0 %273, %v271
        %v275 = vpop.permute.xlu0 %274
        %v278 = vsel %vm230, %v269, 0
        %280 = vmatpush.msra.mxu0 0.0
        %281 = vmatpush.msra.mxu0 0.0
        %282 = vmatpush.msra.mxu0 0.0
        %283 = vmatpush.msra.mxu0 0.0
        %284 = vmatpush.msra.mxu0 0.0
        %285 = vmatpush.msra.mxu0 0.0
        %286 = vmatpush.msra.mxu0 0.0
        %287 = vmatpush.msra.mxu0 0.0
        %288 = vmatpush.msra.mxu0 0.0
        %289 = vmatpush.msra.mxu0 0.0
        %290 = vmatpush.msra.mxu0 0.0
        %291 = vmatpush.msra.mxu0 0.0
        %292 = vmatpush.msra.mxu0 0.0
        %293 = vmatpush.msra.mxu0 %v267
        %294 = vmatpush.msra.mxu0 %v266
        %295 = vmatpush.msra.mxu0 %v265
        %296 = vmatmul.f32.gmra.mxu0 %v278
        %v297 = vpop.f32.mrf.mxu0
        %v298 = vadd.f32 %v275, %v297
        %299 = vdwg.mxu0
        %v300 = vadd.f32 %v188, %v298
        %v301 = vmul.f32 %v300, 0.01
        %v302 = vmax.f32 %v300, %v301
        %vm303 = vcmp.ge.s32.totalorder %v202, 3
        %vm304 = vcmp.lt.s32.totalorder %v202, 125
        %305 = vrot.lane.b32.xlu0 %v302, 3
        %v306 = vpop.permute.xlu0 %305
        %v307 = vsel %vm303, 1, 0
        %vm308 = vcmp.eq.s32.totalorder %v307, 1
        %v309 = vsel %vm308, %v306, 0.0
        %310 = vrot.lane.b32.xlu0 %v302, 125
        %v311 = vpop.permute.xlu0 %310
        %v312 = vsel %vm304, 1, 0
        %vm313 = vcmp.eq.s32.totalorder %v312, 1
        %v314 = vsel %vm313, %v311, 0.0
        %315 = vst [vmem:[#allocation2] sm:$0xff] %v309
        %316 = vst [vmem:[#allocation2 + $0x8] sm:$0xff] %v302
        %317 = vst [vmem:[#allocation2 + $0x10] sm:$0xff] %v314
        %v318 = vld [vmem:[#allocation2] sm:$0xff]
        %v319 = vld [vmem:[#allocation2 + $0x8] sm:$0xff]
        %v320 = vld [vmem:[#allocation2 + $0x10] sm:$0xff]
        %s321 = scalar_lea.vmem %s1, 16
        %v322 = vld [vmem:[%s321] sm:$0xff]
        %s323 = scalar_lea.vmem %s2, 16
        %v324 = vld [vmem:[%s323] sm:$0xff]
        %326 = vset.pattern.permute.xlu0 0
        %327 = vperm.xlu0 %326, %v324
        %v328 = vpop.permute.xlu0 %327
        %v331 = vsel %vm230, %v322, 0
        %333 = vmatpush.msra.mxu0 0.0
        %334 = vmatpush.msra.mxu0 0.0
        %335 = vmatpush.msra.mxu0 0.0
        %336 = vmatpush.msra.mxu0 0.0
        %337 = vmatpush.msra.mxu0 0.0
        %338 = vmatpush.msra.mxu0 0.0
        %339 = vmatpush.msra.mxu0 0.0
        %340 = vmatpush.msra.mxu0 0.0
        %341 = vmatpush.msra.mxu0 0.0
        %342 = vmatpush.msra.mxu0 0.0
        %343 = vmatpush.msra.mxu0 0.0
        %344 = vmatpush.msra.mxu0 0.0
        %345 = vmatpush.msra.mxu0 0.0
        %346 = vmatpush.msra.mxu0 %v320
        %347 = vmatpush.msra.mxu0 %v319
        %348 = vmatpush.msra.mxu0 %v318
        %349 = vmatmul.f32.gmra.mxu0 %v331
        %v350 = vpop.f32.mrf.mxu0
        %v351 = vadd.f32 %v328, %v350
        %352 = vdwg.mxu0
        %v353 = vmul.f32 %v351, 0.01
        %v354 = vmax.f32 %v351, %v353
        %355 = vrot.lane.b32.xlu0 %v354, 1
        %v356 = vpop.permute.xlu0 %355
        %v357 = vsel %vm210, %v356, 0.0
        %358 = vrot.lane.b32.xlu0 %v354, 127
        %v359 = vpop.permute.xlu0 %358
        %v360 = vsel %vm215, %v359, 0.0
        %361 = vst [vmem:[#allocation2] sm:$0xff] %v357
        %362 = vst [vmem:[#allocation2 + $0x8] sm:$0xff] %v354
        %363 = vst [vmem:[#allocation2 + $0x10] sm:$0xff] %v360
        %v364 = vld [vmem:[#allocation2] sm:$0xff]
        %v365 = vld [vmem:[#allocation2 + $0x8] sm:$0xff]
        %v366 = vld [vmem:[#allocation2 + $0x10] sm:$0xff]
        %s367 = scalar_lea.vmem %s1, 24
        %v368 = vld [vmem:[%s367] sm:$0xff]
        %s369 = scalar_lea.vmem %s2, 24
        %v370 = vld [vmem:[%s369] sm:$0xff]
        %372 = vset.pattern.permute.xlu0 0
        %373 = vperm.xlu0 %372, %v370
        %v374 = vpop.permute.xlu0 %373
        %v377 = vsel %vm230, %v368, 0
        %379 = vmatpush.msra.mxu0 0.0
        %380 = vmatpush.msra.mxu0 0.0
        %381 = vmatpush.msra.mxu0 0.0
        %382 = vmatpush.msra.mxu0 0.0
        %383 = vmatpush.msra.mxu0 0.0
        %384 = vmatpush.msra.mxu0 0.0
        %385 = vmatpush.msra.mxu0 0.0
        %386 = vmatpush.msra.mxu0 0.0
        %387 = vmatpush.msra.mxu0 0.0
        %388 = vmatpush.msra.mxu0 0.0
        %389 = vmatpush.msra.mxu0 0.0
        %390 = vmatpush.msra.mxu0 0.0
        %391 = vmatpush.msra.mxu0 0.0
        %392 = vmatpush.msra.mxu0 %v366
        %393 = vmatpush.msra.mxu0 %v365
        %394 = vmatpush.msra.mxu0 %v364
        %395 = vmatmul.f32.gmra.mxu0 %v377
        %v396 = vpop.f32.mrf.mxu0
        %v397 = vadd.f32 %v374, %v396
        %398 = vdwg.mxu0
        %v399 = vadd.f32 %v300, %v397
        %v400 = vmul.f32 %v399, 0.01
        %v401 = vmax.f32 %v399, %v400
        %vm402 = vcmp.ge.s32.totalorder %v202, 9
        %vm403 = vcmp.lt.s32.totalorder %v202, 119
        %404 = vrot.lane.b32.xlu0 %v401, 9
        %v405 = vpop.permute.xlu0 %404
        %v406 = vsel %vm402, 1, 0
        %vm407 = vcmp.eq.s32.totalorder %v406, 1
        %v408 = vsel %vm407, %v405, 0.0
        %409 = vrot.lane.b32.xlu0 %v401, 119
        %v410 = vpop.permute.xlu0 %409
        %v411 = vsel %vm403, 1, 0
        %vm412 = vcmp.eq.s32.totalorder %v411, 1
        %v413 = vsel %vm412, %v410, 0.0
        %414 = vst [vmem:[#allocation2] sm:$0xff] %v408
        %415 = vst [vmem:[#allocation2 + $0x8] sm:$0xff] %v401
        %416 = vst [vmem:[#allocation2 + $0x10] sm:$0xff] %v413
        %v417 = vld [vmem:[#allocation2] sm:$0xff]
        %v418 = vld [vmem:[#allocation2 + $0x8] sm:$0xff]
        %v419 = vld [vmem:[#allocation2 + $0x10] sm:$0xff]
        %s420 = scalar_lea.vmem %s1, 32
        %v421 = vld [vmem:[%s420] sm:$0xff]
        %s422 = scalar_lea.vmem %s2, 32
        %v423 = vld [vmem:[%s422] sm:$0xff]
        %425 = vset.pattern.permute.xlu0 0
        %426 = vperm.xlu0 %425, %v423
        %v427 = vpop.permute.xlu0 %426
        %v430 = vsel %vm230, %v421, 0
        %432 = vmatpush.msra.mxu0 0.0
        %433 = vmatpush.msra.mxu0 0.0
        %434 = vmatpush.msra.mxu0 0.0
        %435 = vmatpush.msra.mxu0 0.0
        %436 = vmatpush.msra.mxu0 0.0
        %437 = vmatpush.msra.mxu0 0.0
        %438 = vmatpush.msra.mxu0 0.0
        %439 = vmatpush.msra.mxu0 0.0
        %440 = vmatpush.msra.mxu0 0.0
        %441 = vmatpush.msra.mxu0 0.0
        %442 = vmatpush.msra.mxu0 0.0
        %443 = vmatpush.msra.mxu0 0.0
        %444 = vmatpush.msra.mxu0 0.0
        %445 = vmatpush.msra.mxu0 %v419
        %446 = vmatpush.msra.mxu0 %v418
        %447 = vmatpush.msra.mxu0 %v417
        %448 = vmatmul.f32.gmra.mxu0 %v430
        %v449 = vpop.f32.mrf.mxu0
        %v450 = vadd.f32 %v427, %v449
        %451 = vdwg.mxu0
        %v452 = vmul.f32 %v450, 0.01
        %v453 = vmax.f32 %v450, %v452
        %454 = vrot.lane.b32.xlu0 %v453, 1
        %v455 = vpop.permute.xlu0 %454
        %v456 = vsel %vm210, %v455, 0.0
        %457 = vrot.lane.b32.xlu0 %v453, 127
        %v458 = vpop.permute.xlu0 %457
        %v459 = vsel %vm215, %v458, 0.0
        %460 = vst [vmem:[#allocation2] sm:$0xff] %v456
        %461 = vst [vmem:[#allocation2 + $0x8] sm:$0xff] %v453
        %462 = vst [vmem:[#allocation2 + $0x10] sm:$0xff] %v459
        %v463 = vld [vmem:[#allocation2] sm:$0xff]
        %v464 = vld [vmem:[#allocation2 + $0x8] sm:$0xff]
        %v465 = vld [vmem:[#allocation2 + $0x10] sm:$0xff]
        %s466 = scalar_lea.vmem %s1, 40
        %v467 = vld [vmem:[%s466] sm:$0xff]
        %s468 = scalar_lea.vmem %s2, 40
        %v469 = vld [vmem:[%s468] sm:$0xff]
        %471 = vset.pattern.permute.xlu0 0
        %472 = vperm.xlu0 %471, %v469
        %v473 = vpop.permute.xlu0 %472
        %v476 = vsel %vm230, %v467, 0
        %478 = vmatpush.msra.mxu0 0.0
        %479 = vmatpush.msra.mxu0 0.0
        %480 = vmatpush.msra.mxu0 0.0
        %481 = vmatpush.msra.mxu0 0.0
        %482 = vmatpush.msra.mxu0 0.0
        %483 = vmatpush.msra.mxu0 0.0
        %484 = vmatpush.msra.mxu0 0.0
        %485 = vmatpush.msra.mxu0 0.0
        %486 = vmatpush.msra.mxu0 0.0
        %487 = vmatpush.msra.mxu0 0.0
        %488 = vmatpush.msra.mxu0 0.0
        %489 = vmatpush.msra.mxu0 0.0
        %490 = vmatpush.msra.mxu0 0.0
        %491 = vmatpush.msra.mxu0 %v465
        %492 = vmatpush.msra.mxu0 %v464
        %493 = vmatpush.msra.mxu0 %v463
        %494 = vmatmul.f32.gmra.mxu0 %v476
        %v495 = vpop.f32.mrf.mxu0
        %v496 = vadd.f32 %v473, %v495
        %497 = vdwg.mxu0
        %v498 = vadd.f32 %v399, %v496
        %v499 = vmul.f32 %v498, 0.01
        %v500 = vmax.f32 %v498, %v499
        %vm501 = vcmp.ge.s32.totalorder %v202, 27
        %vm502 = vcmp.lt.s32.totalorder %v202, 101
        %503 = vrot.lane.b32.xlu0 %v500, 27
        %v504 = vpop.permute.xlu0 %503
        %v505 = vsel %vm501, 1, 0
        %vm506 = vcmp.eq.s32.totalorder %v505, 1
        %v507 = vsel %vm506, %v504, 0.0
        %508 = vrot.lane.b32.xlu0 %v500, 101
        %v509 = vpop.permute.xlu0 %508
        %v510 = vsel %vm502, 1, 0
        %vm511 = vcmp.eq.s32.totalorder %v510, 1
        %v512 = vsel %vm511, %v509, 0.0
        %513 = vst [vmem:[#allocation2] sm:$0xff] %v507
        %514 = vst [vmem:[#allocation2 + $0x8] sm:$0xff] %v500
        %515 = vst [vmem:[#allocation2 + $0x10] sm:$0xff] %v512
        %v516 = vld [vmem:[#allocation2] sm:$0xff]
        %v517 = vld [vmem:[#allocation2 + $0x8] sm:$0xff]
        %v518 = vld [vmem:[#allocation2 + $0x10] sm:$0xff]
        %s519 = scalar_lea.vmem %s1, 48
        %v520 = vld [vmem:[%s519] sm:$0xff]
        %s521 = scalar_lea.vmem %s2, 48
        %v522 = vld [vmem:[%s521] sm:$0xff]
        %524 = vset.pattern.permute.xlu0 0
        %525 = vperm.xlu0 %524, %v522
        %v526 = vpop.permute.xlu0 %525
        %v529 = vsel %vm230, %v520, 0
        %531 = vmatpush.msra.mxu0 0.0
        %532 = vmatpush.msra.mxu0 0.0
        %533 = vmatpush.msra.mxu0 0.0
        %534 = vmatpush.msra.mxu0 0.0
        %535 = vmatpush.msra.mxu0 0.0
        %536 = vmatpush.msra.mxu0 0.0
        %537 = vmatpush.msra.mxu0 0.0
        %538 = vmatpush.msra.mxu0 0.0
        %539 = vmatpush.msra.mxu0 0.0
        %540 = vmatpush.msra.mxu0 0.0
        %541 = vmatpush.msra.mxu0 0.0
        %542 = vmatpush.msra.mxu0 0.0
        %543 = vmatpush.msra.mxu0 0.0
        %544 = vmatpush.msra.mxu0 %v518
        %545 = vmatpush.msra.mxu0 %v517
        %546 = vmatpush.msra.mxu0 %v516
        %547 = vmatmul.f32.gmra.mxu0 %v529
        %v548 = vpop.f32.mrf.mxu0
        %v549 = vadd.f32 %v526, %v548
        %550 = vdwg.mxu0
        %v551 = vmul.f32 %v549, 0.01
        %v552 = vmax.f32 %v549, %v551
        %553 = vrot.lane.b32.xlu0 %v552, 1
        %v554 = vpop.permute.xlu0 %553
        %v555 = vsel %vm210, %v554, 0.0
        %556 = vrot.lane.b32.xlu0 %v552, 127
        %v557 = vpop.permute.xlu0 %556
        %v558 = vsel %vm215, %v557, 0.0
        %559 = vst [vmem:[#allocation2] sm:$0xff] %v555
        %560 = vst [vmem:[#allocation2 + $0x8] sm:$0xff] %v552
        %561 = vst [vmem:[#allocation2 + $0x10] sm:$0xff] %v558
        %v562 = vld [vmem:[#allocation2] sm:$0xff]
        %v563 = vld [vmem:[#allocation2 + $0x8] sm:$0xff]
        %v564 = vld [vmem:[#allocation2 + $0x10] sm:$0xff]
        %s565 = scalar_lea.vmem %s1, 56
        %v566 = vld [vmem:[%s565] sm:$0xff]
        %s567 = scalar_lea.vmem %s2, 56
        %v568 = vld [vmem:[%s567] sm:$0xff]
        %570 = vset.pattern.permute.xlu0 0
        %571 = vperm.xlu0 %570, %v568
        %v572 = vpop.permute.xlu0 %571
        %v575 = vsel %vm230, %v566, 0
        %577 = vmatpush.msra.mxu0 0.0
        %578 = vmatpush.msra.mxu0 0.0
        %579 = vmatpush.msra.mxu0 0.0
        %580 = vmatpush.msra.mxu0 0.0
        %581 = vmatpush.msra.mxu0 0.0
        %582 = vmatpush.msra.mxu0 0.0
        %583 = vmatpush.msra.mxu0 0.0
        %584 = vmatpush.msra.mxu0 0.0
        %585 = vmatpush.msra.mxu0 0.0
        %586 = vmatpush.msra.mxu0 0.0
        %587 = vmatpush.msra.mxu0 0.0
        %588 = vmatpush.msra.mxu0 0.0
        %589 = vmatpush.msra.mxu0 0.0
        %590 = vmatpush.msra.mxu0 %v564
        %591 = vmatpush.msra.mxu0 %v563
        %592 = vmatpush.msra.mxu0 %v562
        %593 = vmatmul.f32.gmra.mxu0 %v575
        %v594 = vpop.f32.mrf.mxu0
        %v595 = vadd.f32 %v572, %v594
        %596 = vdwg.mxu0
        %v597 = vadd.f32 %v498, %v595
        %598 = vst [vmem:[%s187] sm:$0xff] %v597
        %s599 = sand.u32 %s96, 1
        %s600 = scalar_lea.sflag [#allocation5], %s599
        %s601 = sand.u32 %s96, 1
        %s602 = smul.addr %s601, 8
        %s603 = scalar_lea.vmem [#allocation6], %s602
        // Predicated region
        $region37: #{tpu_custom_call.1} parent=31 // pred_check
          %p604 = pneg %p106
        $region38: #{tpu_custom_call.1} parent=31 // pred_check_branch
          %606 = sbr.rel (%p604) target = $region40
        $region39: #{tpu_custom_call.1} parent=31 // pred_region
          %608 = vsyncadd %s600, 0
          %s609 = smul.addr %s20, 8
          %s610 = scalar_lea.hbm %s3, %s609
          %s612 = sshll.u32 %s603, 4
          %s613 = int_to_ptr.vmem [resolvable:$true] %s612
          %s614 = sshll.u32 %s610, 4
          %s615 = int_to_ptr.hbm [resolvable:$true] %s614
          %617 = dma.vmem_to_hbm [thread:$0]  %s613, 128, %s615, %s600
        $region40: #{tpu_custom_call.1} parent=31 // pred_fallthru
          _
      $region32: #{tpu_custom_call.1} parent=5 // pred_fallthru
        _
      %p618 = scmp.le.s32.totalorder 2, %s15
      // Predicated region
      $region41: #{tpu_custom_call.1} parent=5 // pred_check
        %p619 = pneg %p618
      $region42: #{tpu_custom_call.1} parent=5 // pred_check_branch
        %621 = sbr.rel (%p619) target = $region44
      $region43: #{tpu_custom_call.1} parent=5 // pred_region
        %s622 = ssub.s32 %s15, 2
        // Predicated region
        $region45: #{tpu_custom_call.1} parent=43 // pred_check
          %p623 = pneg %p112
        $region46: #{tpu_custom_call.1} parent=43 // pred_check_branch
          %625 = sbr.rel (%p623) target = $region48
        $region47: #{tpu_custom_call.1} parent=43 // pred_region
          %s626 = sand.u32 %s97, 1
          %s627 = scalar_lea.sflag [#allocation5], %s626
          %s628 = sand.u32 %s97, 1
          %s629 = smul.addr %s628, 8
          %s630 = scalar_lea.vmem [#allocation6], %s629
          %632 = dma.done %s627, 128
        $region48: #{tpu_custom_call.1} parent=43 // pred_fallthru
          _
      $region44: #{tpu_custom_call.1} parent=5 // pred_fallthru
        _
    $region6: #{tpu_custom_call.1} parent=1 // loop_footer
      %s19 = sadd.s32 1, %s15
    $region7: #{tpu_custom_call.1} parent=1 // loop_footer_branch
      %14 = sbr.rel target = $region3
    $region8: #{tpu_custom_call.1} parent=1 // loop_exit
      _
    %633 = vsyncpa [#allocation4], 1
    %s634 = scalar_lea.sflag [#allocation4], 1
    %635 = vsyncpa %s634, 1
    %636 = vsyncpa [#allocation5], 1
    %s637 = scalar_lea.sflag [#allocation5], 1
    %638 = vsyncpa %s637, 1

// kernel: tpu_custom_call.1
$region0: #{tpu_custom_call.1}
  #allocation0 [shape = 'u32[]', space=smem, size = 0x4, offset = 0x4, fixed_abs, tag = 'smem constant byte address 0x4 - core index']
  #allocation1 [shape = 'u32[72,128]{1,0:T(1,128)}', space=vmem, size = 0x9000, scoped, tag = 'internal scratch']
  #allocation2 [shape = 'f32[24,128]{1,0:T(8,128)}', space=vmem, size = 0x3000, scoped, tag = 'scratch operand']
  %s0 = inlined_call_operand.hbm [shape: f32[4,8,128], index: 0, kind: input, shape index: {}]
  %s1 = inlined_call_operand.vmem [shape: f32[8,8,24], index: 1, kind: input, shape index: {}]
  %s2 = inlined_call_operand.vmem [shape: f32[8,8,1], index: 2, kind: input, shape index: {}]
  %s3 = inlined_call_operand.hbm [shape: f32[4,8,128], index: 3, kind: output, shape index: {}]
  %s4 = sld [smem:[#allocation0]]
  $region49: #{tpu_custom_call.1} parent=0
    _
  %s6 = ssub.s32 1, %s4
  %s7 = scalar_select 0, %s6, %s4
  $region1: #{tpu_custom_call.1} parent=0
    #allocation3 [shape = 'u8[8192]{0}', space=vmem, size = 0x2000, scoped, tag = 'input window, operand 0']
    #allocation4 [shape = 's32[2]{0}', space=sflag, size = 0x8, scoped, tag = 'scoped memory for tpu_custom_call.1']
    #allocation5 [shape = 's32[2]{0}', space=sflag, size = 0x8, scoped, tag = 'scoped memory for tpu_custom_call.1']
    #allocation6 [shape = 'u8[8192]{0}', space=vmem, size = 0x2000, scoped, tag = 'output window, operand 0']
    %8 = vsyncpa [#allocation4], 0
    %s9 = scalar_lea.sflag [#allocation4], 1
    %10 = vsyncpa %s9, 0
    %11 = vsyncpa [#allocation5], 0
    %s12 = scalar_lea.sflag [#allocation5], 1
    %13 = vsyncpa %s12, 0
    loop: start=0, step=1, limit=6
    $region2: #{tpu_custom_call.1} parent=1 // loop_pre_header
      _
    $region3: #{tpu_custom_call.1} parent=1 // loop_header
      %s15 = sphi 0, %s19
      %p16 = scmp.ge.s32.totalorder %s15, 6
      %s25 = sphi 0, %s27
      %s28 = sphi 0, %s25
      %s29 = sphi 0, %s28
      %s45 = sphi 0, %s29
      %s49 = sphi 0, %s49
      %s51 = sphi 0, %s49
      %s52 = sphi 0, %s51
      %s66 = sphi 0, %s52
      %s70 = sphi 0, %s70
      %s72 = sphi 0, %s70
      %s73 = sphi 0, %s72
      %s87 = sphi 0, %s73
      %s93 = sphi 0, %s95
      %s96 = sphi 0, %s93
      %s97 = sphi 0, %s96
      %s113 = sphi 0, %s97
    $region4: #{tpu_custom_call.1} parent=1 // loop_header_branch
      %18 = sbr.rel (%p16) target = $region8
    $region5: #{tpu_custom_call.1} parent=1 // loop_body
      %s20 = ssub.s32 %s15, 1
      %s21 = ssub.s32 %s15, 2
      %s22 = sadd.s32 %s15, 1
      %s23 = ssub.s32 %s15, %s22
      %p24 = scmp.eq.s32.totalorder %s23, 0
      %s26 = sadd.s32 %s25, 1
      %s27 = scalar_select %p24, %s25, %s26
      %p30 = pneg %p24
      %p31 = scmp.eq.s32.totalorder %s15, 3
      %p32 = por %p30, %p31
      %p33 = scmp.ne.s32.totalorder %s25, %s28
      %p34 = scmp.eq.s32.totalorder %s15, 0
      %p35 = por %p33, %p34
      %p36 = scmp.ne.s32.totalorder %s25, %s28
      %p37 = scmp.eq.s32.totalorder %s20, 3
      %p38 = por %p36, %p37
      %p39 = scmp.ne.s32.totalorder %s28, %s29
      %p40 = scmp.eq.s32.totalorder %s20, 0
      %p41 = por %p39, %p40
      %p42 = scmp.ne.s32.totalorder %s28, %s29
      %p43 = scmp.eq.s32.totalorder %s21, 3
      %p44 = por %p42, %p43
      %p46 = scmp.ne.s32.totalorder %s29, %s45
      %p47 = scmp.eq.s32.totalorder %s21, 0
      %p48 = por %p46, %p47
      %s50 = sadd.s32 %s49, 1
      %p53 = scmp.eq.s32.totalorder %s15, 3
      %p54 = scmp.ne.s32.totalorder %s49, %s51
      %p55 = scmp.eq.s32.totalorder %s15, 0
      %p56 = por %p54, %p55
      %p57 = scmp.ne.s32.totalorder %s49, %s51
      %p58 = scmp.eq.s32.totalorder %s20, 3
      %p59 = por %p57, %p58
      %p60 = scmp.ne.s32.totalorder %s51, %s52
      %p61 = scmp.eq.s32.totalorder %s20, 0
      %p62 = por %p60, %p61
      %p63 = scmp.ne.s32.totalorder %s51, %s52
      %p64 = scmp.eq.s32.totalorder %s21, 3
      %p65 = por %p63, %p64
      %p67 = scmp.ne.s32.totalorder %s52, %s66
      %p68 = scmp.eq.s32.totalorder %s21, 0
      %p69 = por %p67, %p68
      %s71 = sadd.s32 %s70, 1
      %p74 = scmp.eq.s32.totalorder %s15, 3
      %p75 = scmp.ne.s32.totalorder %s70, %s72
      %p76 = scmp.eq.s32.totalorder %s15, 0
      %p77 = por %p75, %p76
      %p78 = scmp.ne.s32.totalorder %s70, %s72
      %p79 = scmp.eq.s32.totalorder %s20, 3
      %p80 = por %p78, %p79
      %p81 = scmp.ne.s32.totalorder %s72, %s73
      %p82 = scmp.eq.s32.totalorder %s20, 0
      %p83 = por %p81, %p82
      %p84 = scmp.ne.s32.totalorder %s72, %s73
      %p85 = scmp.eq.s32.totalorder %s21, 3
      %p86 = por %p84, %p85
      %p88 = scmp.ne.s32.totalorder %s73, %s87
      %p89 = scmp.eq.s32.totalorder %s21, 0
      %p90 = por %p88, %p89
      %s91 = ssub.s32 %s15, %s22
      %p92 = scmp.eq.s32.totalorder %s91, 0
      %s94 = sadd.s32 %s93, 1
      %s95 = scalar_select %p92, %s93, %s94
      %p98 = pneg %p92
      %p99 = scmp.eq.s32.totalorder %s15, 3
      %p100 = por %p98, %p99
      %p101 = scmp.ne.s32.totalorder %s93, %s96
      %p102 = scmp.eq.s32.totalorder %s15, 0
      %p103 = por %p101, %p102
      %p104 = scmp.ne.s32.totalorder %s93, %s96
      %p105 = scmp.eq.s32.totalorder %s20, 3
      %p106 = por %p104, %p105
      %p107 = scmp.ne.s32.totalorder %s96, %s97
      %p108 = scmp.eq.s32.totalorder %s20, 0
      %p109 = por %p107, %p108
      %p110 = scmp.ne.s32.totalorder %s96, %s97
      %p111 = scmp.eq.s32.totalorder %s21, 3
      %p112 = por %p110, %p111
      %p114 = scmp.ne.s32.totalorder %s97, %s113
      %p115 = scmp.eq.s32.totalorder %s21, 0
      %p116 = por %p114, %p115
      %p117 = scmp.le.s32.totalorder 1, %s15
      %p118 = scmp.lt.s32.totalorder %s15, 5
      %p119 = pnand %p117, %p118
      %p120 = pneg %p119
      // Predicated region
      $region9: #{tpu_custom_call.1} parent=5 // pred_check
        _
      $region10: #{tpu_custom_call.1} parent=5 // pred_check_branch
        %122 = sbr.rel (%p119) target = $region12
      $region11: #{tpu_custom_call.1} parent=5 // pred_region
        %s123 = ssub.s32 %s15, 1
        // Predicated region
        $region13: #{tpu_custom_call.1} parent=11 // pred_check
          %p124 = pneg %p62
        $region14: #{tpu_custom_call.1} parent=11 // pred_check_branch
          %126 = sbr.rel (%p124) target = $region16
        $region15: #{tpu_custom_call.1} parent=11 // pred_region
          _
        $region16: #{tpu_custom_call.1} parent=11 // pred_fallthru
          _
        // Predicated region
        $region17: #{tpu_custom_call.1} parent=11 // pred_check
          %p127 = pneg %p83
        $region18: #{tpu_custom_call.1} parent=11 // pred_check_branch
          %129 = sbr.rel (%p127) target = $region20
        $region19: #{tpu_custom_call.1} parent=11 // pred_region
          _
        $region20: #{tpu_custom_call.1} parent=11 // pred_fallthru
          _
      $region12: #{tpu_custom_call.1} parent=5 // pred_fallthru
        _
      %p130 = scmp.lt.s32.totalorder %s15, 4
      // Predicated region
      $region21: #{tpu_custom_call.1} parent=5 // pred_check
        %p131 = pneg %p130
      $region22: #{tpu_custom_call.1} parent=5 // pred_check_branch
        %133 = sbr.rel (%p131) target = $region24
      $region23: #{tpu_custom_call.1} parent=5 // pred_region
        // Predicated region
        $region25: #{tpu_custom_call.1} parent=23 // pred_check
          %p134 = pneg %p35
        $region26: #{tpu_custom_call.1} parent=23 // pred_check_branch
          %136 = sbr.rel (%p134) target = $region28
        $region27: #{tpu_custom_call.1} parent=23 // pred_region
          %s137 = sand.u32 %s25, 1
          %s138 = scalar_lea.sflag [#allocation4], %s137
          %s139 = sand.u32 %s25, 1
          %s140 = smul.addr %s139, 8
          %s141 = scalar_lea.vmem [#allocation3], %s140
          %143 = vsyncadd %s138, 0
          %s144 = smul.addr %s15, 8
          %s145 = scalar_lea.hbm %s0, %s144
          %s147 = sshll.u32 %s145, 4
          %s148 = int_to_ptr.hbm [resolvable:$true] %s147
          %s149 = sshll.u32 %s141, 4
          %s150 = int_to_ptr.vmem [resolvable:$true] %s149
          %152 = dma.hbm_to_vmem [thread:$0]  %s148, 128, %s150, %s138
        $region28: #{tpu_custom_call.1} parent=23 // pred_fallthru
          _
      $region24: #{tpu_custom_call.1} parent=5 // pred_fallthru
        _
      %p153 = scmp.le.s32.totalorder 1, %s15
      %p154 = scmp.lt.s32.totalorder %s15, 5
      %p155 = pnand %p153, %p154
      %p156 = pneg %p155
      // Predicated region
      $region29: #{tpu_custom_call.1} parent=5 // pred_check
        _
      $region30: #{tpu_custom_call.1} parent=5 // pred_check_branch
        %158 = sbr.rel (%p155) target = $region32
      $region31: #{tpu_custom_call.1} parent=5 // pred_region
        %s159 = ssub.s32 %s15, 1
        %s160 = sand.u32 %s28, 1
        %s161 = scalar_lea.sflag [#allocation4], %s160
        %s162 = sand.u32 %s28, 1
        %s163 = smul.addr %s162, 8
        %s164 = scalar_lea.vmem [#allocation3], %s163
        // Predicated region
        $region33: #{tpu_custom_call.1} parent=31 // pred_check
          %p165 = pneg %p41
        $region34: #{tpu_custom_call.1} parent=31 // pred_check_branch
          %167 = sbr.rel (%p165) target = $region36
        $region35: #{tpu_custom_call.1} parent=31 // pred_region
          %169 = dma.done %s161, 128
        $region36: #{tpu_custom_call.1} parent=31 // pred_fallthru
          _
        %s170 = sand.u32 %s28, 1
        %s171 = scalar_lea.sflag [#allocation4], %s170
        %s172 = sand.u32 %s28, 1
        %s173 = smul.addr %s172, 8
        %s174 = scalar_lea.vmem [#allocation3], %s173
        %p175 = pneg %p41
        %p176 = pneg %p38
        %p177 = pneg %p62
        %p178 = pneg %p59
        %p179 = pneg %p83
        %p180 = pneg %p80
        %p181 = pneg %p109
        %p182 = pneg %p106
        %s183 = sand.u32 %s96, 1
        %s184 = scalar_lea.sflag [#allocation5], %s183
        %s185 = sand.u32 %s96, 1
        %s186 = smul.addr %s185, 8
        %s187 = scalar_lea.vmem [#allocation6], %s186
        %v188 = vld [vmem:[%s164] sm:$0xff]
        %v189 = vlaneseq
        %v190 = vand.u32 %v189, 127
        %vm191 = vcmp.lt.s32.totalorder %v190, 0
        %v192 = vsub.s32 0, %v190
        %v193 = vsel %vm191, %v192, %v190
        %v194 = vshrl.u32 %v193, 7
        %v195 = vand.u32 %v193, 127
        %v196 = vsub.s32 0, %v195
        %v197 = vsel %vm191, %v196, %v195
        %vm198 = vcmp.ne.s32.totalorder %v197, 0
        %vm199 = vcmp.lt.s32.totalorder %v197, 0
        %vm200 = vmand %vm199, %vm198
        %v201 = vadd.s32 %v197, 128
        %v202 = vsel %vm200, %v201, %v197
        %v203 = vmul.f32 %v188, 0.01
        %v204 = vmax.f32 %v188, %v203
        %vm205 = vcmp.ge.s32.totalorder %v202, 1
        %vm206 = vcmp.lt.s32.totalorder %v202, 127
        %207 = vrot.lane.b32.xlu0 %v204, 1
        %v208 = vpop.permute.xlu0 %207
        %v209 = vsel %vm205, 1, 0
        %vm210 = vcmp.eq.s32.totalorder %v209, 1
        %v211 = vsel %vm210, %v208, 0.0
        %212 = vrot.lane.b32.xlu0 %v204, 127
        %v213 = vpop.permute.xlu0 %212
        %v214 = vsel %vm206, 1, 0
        %vm215 = vcmp.eq.s32.totalorder %v214, 1
        %v216 = vsel %vm215, %v213, 0.0
        %217 = vst [vmem:[#allocation2] sm:$0xff] %v211
        %218 = vst [vmem:[#allocation2 + $0x8] sm:$0xff] %v204
        %219 = vst [vmem:[#allocation2 + $0x10] sm:$0xff] %v216
        %v220 = vld [vmem:[#allocation2] sm:$0xff]
        %v221 = vld [vmem:[#allocation2 + $0x8] sm:$0xff]
        %v222 = vld [vmem:[#allocation2 + $0x10] sm:$0xff]
        %v223 = vld [vmem:[%s1] sm:$0xff]
        %v224 = vld [vmem:[%s2] sm:$0xff]
        %226 = vset.pattern.permute.xlu0 0
        %227 = vperm.xlu0 %226, %v224
        %v228 = vpop.permute.xlu0 %227
        %vm230 = vcmask 195584
        %v232 = vsel %vm230, %v223, 0
        %234 = vmatpush.msra.mxu0 0.0
        %235 = vmatpush.msra.mxu0 0.0
        %236 = vmatpush.msra.mxu0 0.0
        %237 = vmatpush.msra.mxu0 0.0
        %238 = vmatpush.msra.mxu0 0.0
        %239 = vmatpush.msra.mxu0 0.0
        %240 = vmatpush.msra.mxu0 0.0
        %241 = vmatpush.msra.mxu0 0.0
        %242 = vmatpush.msra.mxu0 0.0
        %243 = vmatpush.msra.mxu0 0.0
        %244 = vmatpush.msra.mxu0 0.0
        %245 = vmatpush.msra.mxu0 0.0
        %246 = vmatpush.msra.mxu0 0.0
        %247 = vmatpush.msra.mxu0 %v222
        %248 = vmatpush.msra.mxu0 %v221
        %249 = vmatpush.msra.mxu0 %v220
        %250 = vmatmul.f32.gmra.mxu0 %v232
        %v251 = vpop.f32.mrf.mxu0
        %v252 = vadd.f32 %v228, %v251
        %253 = vdwg.mxu0
        %v254 = vmul.f32 %v252, 0.01
        %v255 = vmax.f32 %v252, %v254
        %256 = vrot.lane.b32.xlu0 %v255, 1
        %v257 = vpop.permute.xlu0 %256
        %v258 = vsel %vm210, %v257, 0.0
        %259 = vrot.lane.b32.xlu0 %v255, 127
        %v260 = vpop.permute.xlu0 %259
        %v261 = vsel %vm215, %v260, 0.0
        %262 = vst [vmem:[#allocation2] sm:$0xff] %v258
        %263 = vst [vmem:[#allocation2 + $0x8] sm:$0xff] %v255
        %264 = vst [vmem:[#allocation2 + $0x10] sm:$0xff] %v261
        %v265 = vld [vmem:[#allocation2] sm:$0xff]
        %v266 = vld [vmem:[#allocation2 + $0x8] sm:$0xff]
        %v267 = vld [vmem:[#allocation2 + $0x10] sm:$0xff]
        %s268 = scalar_lea.vmem %s1, 8
        %v269 = vld [vmem:[%s268] sm:$0xff]
        %s270 = scalar_lea.vmem %s2, 8
        %v271 = vld [vmem:[%s270] sm:$0xff]
        %273 = vset.pattern.permute.xlu0 0
        %274 = vperm.xlu0 %273, %v271
        %v275 = vpop.permute.xlu0 %274
        %v278 = vsel %vm230, %v269, 0
        %280 = vmatpush.msra.mxu0 0.0
        %281 = vmatpush.msra.mxu0 0.0
        %282 = vmatpush.msra.mxu0 0.0
        %283 = vmatpush.msra.mxu0 0.0
        %284 = vmatpush.msra.mxu0 0.0
        %285 = vmatpush.msra.mxu0 0.0
        %286 = vmatpush.msra.mxu0 0.0
        %287 = vmatpush.msra.mxu0 0.0
        %288 = vmatpush.msra.mxu0 0.0
        %289 = vmatpush.msra.mxu0 0.0
        %290 = vmatpush.msra.mxu0 0.0
        %291 = vmatpush.msra.mxu0 0.0
        %292 = vmatpush.msra.mxu0 0.0
        %293 = vmatpush.msra.mxu0 %v267
        %294 = vmatpush.msra.mxu0 %v266
        %295 = vmatpush.msra.mxu0 %v265
        %296 = vmatmul.f32.gmra.mxu0 %v278
        %v297 = vpop.f32.mrf.mxu0
        %v298 = vadd.f32 %v275, %v297
        %299 = vdwg.mxu0
        %v300 = vadd.f32 %v188, %v298
        %v301 = vmul.f32 %v300, 0.01
        %v302 = vmax.f32 %v300, %v301
        %vm303 = vcmp.ge.s32.totalorder %v202, 3
        %vm304 = vcmp.lt.s32.totalorder %v202, 125
        %305 = vrot.lane.b32.xlu0 %v302, 3
        %v306 = vpop.permute.xlu0 %305
        %v307 = vsel %vm303, 1, 0
        %vm308 = vcmp.eq.s32.totalorder %v307, 1
        %v309 = vsel %vm308, %v306, 0.0
        %310 = vrot.lane.b32.xlu0 %v302, 125
        %v311 = vpop.permute.xlu0 %310
        %v312 = vsel %vm304, 1, 0
        %vm313 = vcmp.eq.s32.totalorder %v312, 1
        %v314 = vsel %vm313, %v311, 0.0
        %315 = vst [vmem:[#allocation2] sm:$0xff] %v309
        %316 = vst [vmem:[#allocation2 + $0x8] sm:$0xff] %v302
        %317 = vst [vmem:[#allocation2 + $0x10] sm:$0xff] %v314
        %v318 = vld [vmem:[#allocation2] sm:$0xff]
        %v319 = vld [vmem:[#allocation2 + $0x8] sm:$0xff]
        %v320 = vld [vmem:[#allocation2 + $0x10] sm:$0xff]
        %s321 = scalar_lea.vmem %s1, 16
        %v322 = vld [vmem:[%s321] sm:$0xff]
        %s323 = scalar_lea.vmem %s2, 16
        %v324 = vld [vmem:[%s323] sm:$0xff]
        %326 = vset.pattern.permute.xlu0 0
        %327 = vperm.xlu0 %326, %v324
        %v328 = vpop.permute.xlu0 %327
        %v331 = vsel %vm230, %v322, 0
        %333 = vmatpush.msra.mxu0 0.0
        %334 = vmatpush.msra.mxu0 0.0
        %335 = vmatpush.msra.mxu0 0.0
        %336 = vmatpush.msra.mxu0 0.0
        %337 = vmatpush.msra.mxu0 0.0
        %338 = vmatpush.msra.mxu0 0.0
        %339 = vmatpush.msra.mxu0 0.0
        %340 = vmatpush.msra.mxu0 0.0
        %341 = vmatpush.msra.mxu0 0.0
        %342 = vmatpush.msra.mxu0 0.0
        %343 = vmatpush.msra.mxu0 0.0
        %344 = vmatpush.msra.mxu0 0.0
        %345 = vmatpush.msra.mxu0 0.0
        %346 = vmatpush.msra.mxu0 %v320
        %347 = vmatpush.msra.mxu0 %v319
        %348 = vmatpush.msra.mxu0 %v318
        %349 = vmatmul.f32.gmra.mxu0 %v331
        %v350 = vpop.f32.mrf.mxu0
        %v351 = vadd.f32 %v328, %v350
        %352 = vdwg.mxu0
        %v353 = vmul.f32 %v351, 0.01
        %v354 = vmax.f32 %v351, %v353
        %355 = vrot.lane.b32.xlu0 %v354, 1
        %v356 = vpop.permute.xlu0 %355
        %v357 = vsel %vm210, %v356, 0.0
        %358 = vrot.lane.b32.xlu0 %v354, 127
        %v359 = vpop.permute.xlu0 %358
        %v360 = vsel %vm215, %v359, 0.0
        %361 = vst [vmem:[#allocation2] sm:$0xff] %v357
        %362 = vst [vmem:[#allocation2 + $0x8] sm:$0xff] %v354
        %363 = vst [vmem:[#allocation2 + $0x10] sm:$0xff] %v360
        %v364 = vld [vmem:[#allocation2] sm:$0xff]
        %v365 = vld [vmem:[#allocation2 + $0x8] sm:$0xff]
        %v366 = vld [vmem:[#allocation2 + $0x10] sm:$0xff]
        %s367 = scalar_lea.vmem %s1, 24
        %v368 = vld [vmem:[%s367] sm:$0xff]
        %s369 = scalar_lea.vmem %s2, 24
        %v370 = vld [vmem:[%s369] sm:$0xff]
        %372 = vset.pattern.permute.xlu0 0
        %373 = vperm.xlu0 %372, %v370
        %v374 = vpop.permute.xlu0 %373
        %v377 = vsel %vm230, %v368, 0
        %379 = vmatpush.msra.mxu0 0.0
        %380 = vmatpush.msra.mxu0 0.0
        %381 = vmatpush.msra.mxu0 0.0
        %382 = vmatpush.msra.mxu0 0.0
        %383 = vmatpush.msra.mxu0 0.0
        %384 = vmatpush.msra.mxu0 0.0
        %385 = vmatpush.msra.mxu0 0.0
        %386 = vmatpush.msra.mxu0 0.0
        %387 = vmatpush.msra.mxu0 0.0
        %388 = vmatpush.msra.mxu0 0.0
        %389 = vmatpush.msra.mxu0 0.0
        %390 = vmatpush.msra.mxu0 0.0
        %391 = vmatpush.msra.mxu0 0.0
        %392 = vmatpush.msra.mxu0 %v366
        %393 = vmatpush.msra.mxu0 %v365
        %394 = vmatpush.msra.mxu0 %v364
        %395 = vmatmul.f32.gmra.mxu0 %v377
        %v396 = vpop.f32.mrf.mxu0
        %v397 = vadd.f32 %v374, %v396
        %398 = vdwg.mxu0
        %v399 = vadd.f32 %v300, %v397
        %v400 = vmul.f32 %v399, 0.01
        %v401 = vmax.f32 %v399, %v400
        %vm402 = vcmp.ge.s32.totalorder %v202, 9
        %vm403 = vcmp.lt.s32.totalorder %v202, 119
        %404 = vrot.lane.b32.xlu0 %v401, 9
        %v405 = vpop.permute.xlu0 %404
        %v406 = vsel %vm402, 1, 0
        %vm407 = vcmp.eq.s32.totalorder %v406, 1
        %v408 = vsel %vm407, %v405, 0.0
        %409 = vrot.lane.b32.xlu0 %v401, 119
        %v410 = vpop.permute.xlu0 %409
        %v411 = vsel %vm403, 1, 0
        %vm412 = vcmp.eq.s32.totalorder %v411, 1
        %v413 = vsel %vm412, %v410, 0.0
        %414 = vst [vmem:[#allocation2] sm:$0xff] %v408
        %415 = vst [vmem:[#allocation2 + $0x8] sm:$0xff] %v401
        %416 = vst [vmem:[#allocation2 + $0x10] sm:$0xff] %v413
        %v417 = vld [vmem:[#allocation2] sm:$0xff]
        %v418 = vld [vmem:[#allocation2 + $0x8] sm:$0xff]
        %v419 = vld [vmem:[#allocation2 + $0x10] sm:$0xff]
        %s420 = scalar_lea.vmem %s1, 32
        %v421 = vld [vmem:[%s420] sm:$0xff]
        %s422 = scalar_lea.vmem %s2, 32
        %v423 = vld [vmem:[%s422] sm:$0xff]
        %425 = vset.pattern.permute.xlu0 0
        %426 = vperm.xlu0 %425, %v423
        %v427 = vpop.permute.xlu0 %426
        %v430 = vsel %vm230, %v421, 0
        %432 = vmatpush.msra.mxu0 0.0
        %433 = vmatpush.msra.mxu0 0.0
        %434 = vmatpush.msra.mxu0 0.0
        %435 = vmatpush.msra.mxu0 0.0
        %436 = vmatpush.msra.mxu0 0.0
        %437 = vmatpush.msra.mxu0 0.0
        %438 = vmatpush.msra.mxu0 0.0
        %439 = vmatpush.msra.mxu0 0.0
        %440 = vmatpush.msra.mxu0 0.0
        %441 = vmatpush.msra.mxu0 0.0
        %442 = vmatpush.msra.mxu0 0.0
        %443 = vmatpush.msra.mxu0 0.0
        %444 = vmatpush.msra.mxu0 0.0
        %445 = vmatpush.msra.mxu0 %v419
        %446 = vmatpush.msra.mxu0 %v418
        %447 = vmatpush.msra.mxu0 %v417
        %448 = vmatmul.f32.gmra.mxu0 %v430
        %v449 = vpop.f32.mrf.mxu0
        %v450 = vadd.f32 %v427, %v449
        %451 = vdwg.mxu0
        %v452 = vmul.f32 %v450, 0.01
        %v453 = vmax.f32 %v450, %v452
        %454 = vrot.lane.b32.xlu0 %v453, 1
        %v455 = vpop.permute.xlu0 %454
        %v456 = vsel %vm210, %v455, 0.0
        %457 = vrot.lane.b32.xlu0 %v453, 127
        %v458 = vpop.permute.xlu0 %457
        %v459 = vsel %vm215, %v458, 0.0
        %460 = vst [vmem:[#allocation2] sm:$0xff] %v456
        %461 = vst [vmem:[#allocation2 + $0x8] sm:$0xff] %v453
        %462 = vst [vmem:[#allocation2 + $0x10] sm:$0xff] %v459
        %v463 = vld [vmem:[#allocation2] sm:$0xff]
        %v464 = vld [vmem:[#allocation2 + $0x8] sm:$0xff]
        %v465 = vld [vmem:[#allocation2 + $0x10] sm:$0xff]
        %s466 = scalar_lea.vmem %s1, 40
        %v467 = vld [vmem:[%s466] sm:$0xff]
        %s468 = scalar_lea.vmem %s2, 40
        %v469 = vld [vmem:[%s468] sm:$0xff]
        %471 = vset.pattern.permute.xlu0 0
        %472 = vperm.xlu0 %471, %v469
        %v473 = vpop.permute.xlu0 %472
        %v476 = vsel %vm230, %v467, 0
        %478 = vmatpush.msra.mxu0 0.0
        %479 = vmatpush.msra.mxu0 0.0
        %480 = vmatpush.msra.mxu0 0.0
        %481 = vmatpush.msra.mxu0 0.0
        %482 = vmatpush.msra.mxu0 0.0
        %483 = vmatpush.msra.mxu0 0.0
        %484 = vmatpush.msra.mxu0 0.0
        %485 = vmatpush.msra.mxu0 0.0
        %486 = vmatpush.msra.mxu0 0.0
        %487 = vmatpush.msra.mxu0 0.0
        %488 = vmatpush.msra.mxu0 0.0
        %489 = vmatpush.msra.mxu0 0.0
        %490 = vmatpush.msra.mxu0 0.0
        %491 = vmatpush.msra.mxu0 %v465
        %492 = vmatpush.msra.mxu0 %v464
        %493 = vmatpush.msra.mxu0 %v463
        %494 = vmatmul.f32.gmra.mxu0 %v476
        %v495 = vpop.f32.mrf.mxu0
        %v496 = vadd.f32 %v473, %v495
        %497 = vdwg.mxu0
        %v498 = vadd.f32 %v399, %v496
        %v499 = vmul.f32 %v498, 0.01
        %v500 = vmax.f32 %v498, %v499
        %vm501 = vcmp.ge.s32.totalorder %v202, 27
        %vm502 = vcmp.lt.s32.totalorder %v202, 101
        %503 = vrot.lane.b32.xlu0 %v500, 27
        %v504 = vpop.permute.xlu0 %503
        %v505 = vsel %vm501, 1, 0
        %vm506 = vcmp.eq.s32.totalorder %v505, 1
        %v507 = vsel %vm506, %v504, 0.0
        %508 = vrot.lane.b32.xlu0 %v500, 101
        %v509 = vpop.permute.xlu0 %508
        %v510 = vsel %vm502, 1, 0
        %vm511 = vcmp.eq.s32.totalorder %v510, 1
        %v512 = vsel %vm511, %v509, 0.0
        %513 = vst [vmem:[#allocation2] sm:$0xff] %v507
        %514 = vst [vmem:[#allocation2 + $0x8] sm:$0xff] %v500
        %515 = vst [vmem:[#allocation2 + $0x10] sm:$0xff] %v512
        %v516 = vld [vmem:[#allocation2] sm:$0xff]
        %v517 = vld [vmem:[#allocation2 + $0x8] sm:$0xff]
        %v518 = vld [vmem:[#allocation2 + $0x10] sm:$0xff]
        %s519 = scalar_lea.vmem %s1, 48
        %v520 = vld [vmem:[%s519] sm:$0xff]
        %s521 = scalar_lea.vmem %s2, 48
        %v522 = vld [vmem:[%s521] sm:$0xff]
        %524 = vset.pattern.permute.xlu0 0
        %525 = vperm.xlu0 %524, %v522
        %v526 = vpop.permute.xlu0 %525
        %v529 = vsel %vm230, %v520, 0
        %531 = vmatpush.msra.mxu0 0.0
        %532 = vmatpush.msra.mxu0 0.0
        %533 = vmatpush.msra.mxu0 0.0
        %534 = vmatpush.msra.mxu0 0.0
        %535 = vmatpush.msra.mxu0 0.0
        %536 = vmatpush.msra.mxu0 0.0
        %537 = vmatpush.msra.mxu0 0.0
        %538 = vmatpush.msra.mxu0 0.0
        %539 = vmatpush.msra.mxu0 0.0
        %540 = vmatpush.msra.mxu0 0.0
        %541 = vmatpush.msra.mxu0 0.0
        %542 = vmatpush.msra.mxu0 0.0
        %543 = vmatpush.msra.mxu0 0.0
        %544 = vmatpush.msra.mxu0 %v518
        %545 = vmatpush.msra.mxu0 %v517
        %546 = vmatpush.msra.mxu0 %v516
        %547 = vmatmul.f32.gmra.mxu0 %v529
        %v548 = vpop.f32.mrf.mxu0
        %v549 = vadd.f32 %v526, %v548
        %550 = vdwg.mxu0
        %v551 = vmul.f32 %v549, 0.01
        %v552 = vmax.f32 %v549, %v551
        %553 = vrot.lane.b32.xlu0 %v552, 1
        %v554 = vpop.permute.xlu0 %553
        %v555 = vsel %vm210, %v554, 0.0
        %556 = vrot.lane.b32.xlu0 %v552, 127
        %v557 = vpop.permute.xlu0 %556
        %v558 = vsel %vm215, %v557, 0.0
        %559 = vst [vmem:[#allocation2] sm:$0xff] %v555
        %560 = vst [vmem:[#allocation2 + $0x8] sm:$0xff] %v552
        %561 = vst [vmem:[#allocation2 + $0x10] sm:$0xff] %v558
        %v562 = vld [vmem:[#allocation2] sm:$0xff]
        %v563 = vld [vmem:[#allocation2 + $0x8] sm:$0xff]
        %v564 = vld [vmem:[#allocation2 + $0x10] sm:$0xff]
        %s565 = scalar_lea.vmem %s1, 56
        %v566 = vld [vmem:[%s565] sm:$0xff]
        %s567 = scalar_lea.vmem %s2, 56
        %v568 = vld [vmem:[%s567] sm:$0xff]
        %570 = vset.pattern.permute.xlu0 0
        %571 = vperm.xlu0 %570, %v568
        %v572 = vpop.permute.xlu0 %571
        %v575 = vsel %vm230, %v566, 0
        %577 = vmatpush.msra.mxu0 0.0
        %578 = vmatpush.msra.mxu0 0.0
        %579 = vmatpush.msra.mxu0 0.0
        %580 = vmatpush.msra.mxu0 0.0
        %581 = vmatpush.msra.mxu0 0.0
        %582 = vmatpush.msra.mxu0 0.0
        %583 = vmatpush.msra.mxu0 0.0
        %584 = vmatpush.msra.mxu0 0.0
        %585 = vmatpush.msra.mxu0 0.0
        %586 = vmatpush.msra.mxu0 0.0
        %587 = vmatpush.msra.mxu0 0.0
        %588 = vmatpush.msra.mxu0 0.0
        %589 = vmatpush.msra.mxu0 0.0
        %590 = vmatpush.msra.mxu0 %v564
        %591 = vmatpush.msra.mxu0 %v563
        %592 = vmatpush.msra.mxu0 %v562
        %593 = vmatmul.f32.gmra.mxu0 %v575
        %v594 = vpop.f32.mrf.mxu0
        %v595 = vadd.f32 %v572, %v594
        %596 = vdwg.mxu0
        %v597 = vadd.f32 %v498, %v595
        %598 = vst [vmem:[%s187] sm:$0xff] %v597
        %s599 = sand.u32 %s96, 1
        %s600 = scalar_lea.sflag [#allocation5], %s599
        %s601 = sand.u32 %s96, 1
        %s602 = smul.addr %s601, 8
        %s603 = scalar_lea.vmem [#allocation6], %s602
        // Predicated region
        $region37: #{tpu_custom_call.1} parent=31 // pred_check
          %p604 = pneg %p106
        $region38: #{tpu_custom_call.1} parent=31 // pred_check_branch
          %606 = sbr.rel (%p604) target = $region40
        $region39: #{tpu_custom_call.1} parent=31 // pred_region
          %608 = vsyncadd %s600, 0
          %s609 = smul.addr %s20, 8
          %s610 = scalar_lea.hbm %s3, %s609
          %s612 = sshll.u32 %s603, 4
          %s613 = int_to_ptr.vmem [resolvable:$true] %s612
          %s614 = sshll.u32 %s610, 4
          %s615 = int_to_ptr.hbm [resolvable:$true] %s614
          %617 = dma.vmem_to_hbm [thread:$0]  %s613, 128, %s615, %s600
        $region40: #{tpu_custom_call.1} parent=31 // pred_fallthru
          _
      $region32: #{tpu_custom_call.1} parent=5 // pred_fallthru
        _
      %p618 = scmp.le.s32.totalorder 2, %s15
      // Predicated region
      $region41: #{tpu_custom_call.1} parent=5 // pred_check
        %p619 = pneg %p618
      $region42: #{tpu_custom_call.1} parent=5 // pred_check_branch
        %621 = sbr.rel (%p619) target = $region44
      $region43: #{tpu_custom_call.1} parent=5 // pred_region
        %s622 = ssub.s32 %s15, 2
        // Predicated region
        $region45: #{tpu_custom_call.1} parent=43 // pred_check
          %p623 = pneg %p112
        $region46: #{tpu_custom_call.1} parent=43 // pred_check_branch
          %625 = sbr.rel (%p623) target = $region48
        $region47: #{tpu_custom_call.1} parent=43 // pred_region
          %s626 = sand.u32 %s97, 1
          %s627 = scalar_lea.sflag [#allocation5], %s626
          %s628 = sand.u32 %s97, 1
          %s629 = smul.addr %s628, 8
          %s630 = scalar_lea.vmem [#allocation6], %s629
          %632 = dma.done %s627, 128
        $region48: #{tpu_custom_call.1} parent=43 // pred_fallthru
          _
      $region44: #{tpu_custom_call.1} parent=5 // pred_fallthru
        _
    $region6: #{tpu_custom_call.1} parent=1 // loop_footer
      %s19 = sadd.s32 1, %s15
    $region7: #{tpu_custom_call.1} parent=1 // loop_footer_branch
      %14 = sbr.rel target = $region3
    $region8: #{tpu_custom_call.1} parent=1 // loop_exit
      _
    %633 = vsyncpa [#allocation4], 1
    %s634 = scalar_lea.sflag [#allocation4], 1
    %635 = vsyncpa %s634, 1
    %636 = vsyncpa [#allocation5], 1
    %s637 = scalar_lea.sflag [#allocation5], 1
    %638 = vsyncpa %s637, 1

</llo_original>
